<compile_context>
chip_gen: v7x
topology: tpu7x:2x2x1
jax: 0.10.0
libtpu: 0.0.40
codegen_flags: <defaults>
</compile_context>

<pallas_src>
import math

import jax
import jax.numpy as jnp
from jax.experimental import pallas as pl
from jax.experimental.pallas import tpu as pltpu

LANE = 128


def _round_up(n, m):
    return ((n + m - 1) // m) * m


# ----------------------------------------------------------------------------
# Pallas kernel: one batch tile through the whole 5-layer MLP
# ----------------------------------------------------------------------------
def mlp_f_kernel(x_ref,                       # (TB, D_in)
                 w1_ref, b1_ref,              # (D_in, 256), (1, 256)
                 w2_ref, b2_ref,              # (256, 128),  (1, 128)
                 w3_ref, b3_ref,              # (128, 128),  (1, 128)   (padded)
                 w4_ref, b4_ref,              # (128, 128),  (1, 128)   (padded)
                 w5_ref, b5_ref,              # (128, 128),  (1, 128)   (padded)
                 out_ref):                    # (TB, 128)               (padded)
    h = x_ref[...]
    # Static unroll over the 5 layers; activations never leave vregs/VMEM.
    for w_ref, b_ref in ((w1_ref, b1_ref),
                         (w2_ref, b2_ref),
                         (w3_ref, b3_ref),
                         (w4_ref, b4_ref),
                         (w5_ref, b5_ref)):
        w = w_ref[...]
        # Cast activations to the weight dtype (no-op for f32, enables bf16
        # operands on v6e/v7x) while accumulating in f32 on the MXU.
        h = jnp.dot(h.astype(w.dtype), w, preferred_element_type=jnp.float32)
        h = jnp.maximum(h + b_ref[...], 0.0)   # bias + ReLU in f32 (every layer)
    out_ref[...] = h.astype(out_ref.dtype)


# ----------------------------------------------------------------------------
# Wrapper
# ----------------------------------------------------------------------------
def mlp_f_forward(x, kernel_params, num_classes, *, block_b=128):
    """x: (B, input_size); kernel_params: list of (W_padded (in,out), b_padded (1,out))."""
    x = x.astype(jnp.float32)
    B, d_in = x.shape
    out_pad = kernel_params[-1][0].shape[1]            # lane-padded final width (128)

    # Pad the batch so callers never need aligned B; slice rows back below.
    b_pad = _round_up(B, block_b)
    if b_pad != B:
        x = jnp.pad(x, ((0, b_pad - B), (0, 0)))
    grid = (b_pad // block_b,)

    flat_params = []
    in_specs = [pl.BlockSpec((block_b, d_in), lambda i: (i, 0))]
    for w, b in kernel_params:
        flat_params += [w, b]
        # Constant block index -> weights/biases stay VMEM-resident across grid.
        in_specs.append(pl.BlockSpec(w.shape, lambda i: (0, 0)))
        in_specs.append(pl.BlockSpec(b.shape, lambda i: (0, 0)))
    out_spec = pl.BlockSpec((block_b, out_pad), lambda i: (i, 0))

    # Advisory cost estimate for XLA's scheduler (padded FLOP/byte counts).
    flops = 0
    param_bytes = 0
    prev = d_in
    for w, b in kernel_params:
        flops += 2 * b_pad * w.shape[0] * w.shape[1]
        param_bytes += w.size * w.dtype.itemsize + b.size * b.dtype.itemsize
        prev = w.shape[1]
    bytes_accessed = x.size * 4 + b_pad * out_pad * 4 + param_bytes
    cost = pl.CostEstimate(flops=flops, transcendentals=0,
                           bytes_accessed=bytes_accessed)

    out = pl.pallas_call(
        mlp_f_kernel,
        out_shape=jax.ShapeDtypeStruct((b_pad, out_pad), jnp.float32),
        grid_spec=pltpu.PrefetchScalarGridSpec(
            num_scalar_prefetch=0,
            grid=grid,
            in_specs=in_specs,
            out_specs=out_spec),
        compiler_params=pltpu.CompilerParams(
            dimension_semantics=("parallel",)),        # batch tiles -> 2 TCs on v7x
        cost_estimate=cost,
    )(x, *flat_params)

    return out[:B, :num_classes]


# ----------------------------------------------------------------------------
# Deterministic PyTorch-style init (nn.Linear: U(-1/sqrt(fan_in), +1/sqrt(fan_in)))
# Kernel params are pre-transposed to (in, out) and zero-padded to 128 lanes.
# ----------------------------------------------------------------------------
def init_params(key, input_size, layer_sizes=(256, 128, 64, 32, 10),
                weights_dtype=jnp.float32):
    sizes = (input_size,) + tuple(layer_sizes)
    keys = jax.random.split(key, 2 * len(layer_sizes))
    pt_params = []        # PyTorch layout: W (out, in), b (out,)
    kernel_params = []    # kernel layout:  W.T zero-padded to (in_pad, out_pad)
    in_pad = input_size   # fc1 input dim is not padded (block covers full array)
    for li in range(len(layer_sizes)):
        fan_in, fan_out = sizes[li], sizes[li + 1]
        bound = 1.0 / math.sqrt(fan_in)
        w = jax.random.uniform(keys[2 * li], (fan_out, fan_in), jnp.float32,
                               -bound, bound)
        b = jax.random.uniform(keys[2 * li + 1], (fan_out,), jnp.float32,
                               -bound, bound)
        pt_params.append((w, b))

        out_pad = _round_up(fan_out, LANE)
        w_k = jnp.zeros((in_pad, out_pad), jnp.float32)
        w_k = w_k.at[:fan_in, :fan_out].set(w.T)
        b_k = jnp.zeros((1, out_pad), jnp.float32)
        b_k = b_k.at[0, :fan_out].set(b)
        kernel_params.append((w_k.astype(weights_dtype), b_k))
        in_pad = out_pad
    return pt_params, kernel_params


# ----------------------------------------------------------------------------
# Pure-JAX reference (faithful to the PyTorch forward)
# ----------------------------------------------------------------------------
def ref_forward(x, pt_params):
    h = x.astype(jnp.float32)
    for w, b in pt_params:
        h = jnp.maximum(h @ w.T + b, 0.0)
    return h


# ----------------------------------------------------------------------------
if __name__ == "__main__":
    input_size = 64
    num_classes = 10
    B = 200                 # deliberately NOT a multiple of block_b: wrapper pads
    block_b = 128           # padded batch = 256 -> grid of 2 "parallel" steps

    key = jax.random.PRNGKey(0)
    k_x, k_p = jax.random.split(key)
    x = jax.random.normal(k_x, (B, input_size), jnp.float32)

    pt_params, kernel_params = init_params(k_p, input_size)

    out = mlp_f_forward(x, kernel_params, num_classes, block_b=block_b)
    out = jax.block_until_ready(out)

    ref = ref_forward(x, pt_params)
    assert out.shape == (B, num_classes), out.shape
    assert jnp.allclose(out, ref, atol=1e-5, rtol=1e-5), (out, ref)

    print("KERNEL_OK")
</pallas_src>

<mosaic_0001>
module attributes {stable_mosaic.version = 11 : i64} {
  func.func @mlp_f_kernel(%arg0: i32, %arg1: memref<128x64xf32, #tpu.memory_space<vmem>>, %arg2: memref<64x256xf32, #tpu.memory_space<vmem>>, %arg3: memref<1x256xf32, #tpu.memory_space<vmem>>, %arg4: memref<256x128xf32, #tpu.memory_space<vmem>>, %arg5: memref<1x128xf32, #tpu.memory_space<vmem>>, %arg6: memref<128x128xf32, #tpu.memory_space<vmem>>, %arg7: memref<1x128xf32, #tpu.memory_space<vmem>>, %arg8: memref<128x128xf32, #tpu.memory_space<vmem>>, %arg9: memref<1x128xf32, #tpu.memory_space<vmem>>, %arg10: memref<128x128xf32, #tpu.memory_space<vmem>>, %arg11: memref<1x128xf32, #tpu.memory_space<vmem>>, %arg12: memref<128x128xf32, #tpu.memory_space<vmem>>) attributes {dimension_semantics = [#tpu.dimension_semantics<parallel>], iteration_bounds = array<i64: 2>, scalar_prefetch = 0 : i64, scratch_operands = 0 : i64, tpu.core_type = #tpu.core_type<tc>, window_params = [{transform_indices = @transform_0, window_bounds = array<i64: 128, 64>}, {pipeline_mode = #tpu.pipeline_mode<synchronous>, transform_indices = @transform_1, window_bounds = array<i64: 64, 256>}, {pipeline_mode = #tpu.pipeline_mode<synchronous>, transform_indices = @transform_2, window_bounds = array<i64: 1, 256>}, {pipeline_mode = #tpu.pipeline_mode<synchronous>, transform_indices = @transform_3, window_bounds = array<i64: 256, 128>}, {pipeline_mode = #tpu.pipeline_mode<synchronous>, transform_indices = @transform_4, window_bounds = array<i64: 1, 128>}, {pipeline_mode = #tpu.pipeline_mode<synchronous>, transform_indices = @transform_5, window_bounds = array<i64: 128, 128>}, {pipeline_mode = #tpu.pipeline_mode<synchronous>, transform_indices = @transform_6, window_bounds = array<i64: 1, 128>}, {pipeline_mode = #tpu.pipeline_mode<synchronous>, transform_indices = @transform_7, window_bounds = array<i64: 128, 128>}, {pipeline_mode = #tpu.pipeline_mode<synchronous>, transform_indices = @transform_8, window_bounds = array<i64: 1, 128>}, {pipeline_mode = #tpu.pipeline_mode<synchronous>, transform_indices = @transform_9, window_bounds = array<i64: 128, 128>}, {pipeline_mode = #tpu.pipeline_mode<synchronous>, transform_indices = @transform_10, window_bounds = array<i64: 1, 128>}, {transform_indices = @transform_11, window_bounds = array<i64: 128, 128>}]} {
    %c0 = arith.constant 0 : index
    %c0_0 = arith.constant 0 : index
    %0 = vector.load %arg1[%c0, %c0_0] : memref<128x64xf32, #tpu.memory_space<vmem>>, vector<128x64xf32>
    %c0_1 = arith.constant 0 : index
    %c0_2 = arith.constant 0 : index
    %1 = vector.load %arg2[%c0_1, %c0_2] : memref<64x256xf32, #tpu.memory_space<vmem>>, vector<64x256xf32>
    %cst = arith.constant dense<0.000000e+00> : vector<128x256xf32>
    %2 = tpu.matmul %0, %1, %cst {dimension_numbers = #tpu.dot_dimension_numbers<[1], [0], [0], [1], [0, 0, 1, 1], [], []>} : vector<128x64xf32>, vector<64x256xf32>, vector<128x256xf32> -> vector<128x256xf32>
    %c0_3 = arith.constant 0 : index
    %c0_4 = arith.constant 0 : index
    %3 = vector.load %arg3[%c0_3, %c0_4] : memref<1x256xf32, #tpu.memory_space<vmem>>, vector<1x256xf32>
    %4 = vector.broadcast %3 : vector<1x256xf32> to vector<128x256xf32>
    %5 = arith.addf %2, %4 : vector<128x256xf32>
    %cst_5 = arith.constant 0.000000e+00 : f32
    %6 = vector.broadcast %cst_5 : f32 to vector<128x256xf32>
    %7 = arith.maximumf %5, %6 : vector<128x256xf32>
    %c0_6 = arith.constant 0 : index
    %c0_7 = arith.constant 0 : index
    %8 = vector.load %arg4[%c0_6, %c0_7] : memref<256x128xf32, #tpu.memory_space<vmem>>, vector<256x128xf32>
    %cst_8 = arith.constant dense<0.000000e+00> : vector<128x128xf32>
    %9 = tpu.matmul %7, %8, %cst_8 {dimension_numbers = #tpu.dot_dimension_numbers<[1], [0], [0], [1], [0, 0, 1, 1], [], []>} : vector<128x256xf32>, vector<256x128xf32>, vector<128x128xf32> -> vector<128x128xf32>
    %c0_9 = arith.constant 0 : index
    %c0_10 = arith.constant 0 : index
    %10 = vector.load %arg5[%c0_9, %c0_10] : memref<1x128xf32, #tpu.memory_space<vmem>>, vector<1x128xf32>
    %11 = vector.broadcast %10 : vector<1x128xf32> to vector<128x128xf32>
    %12 = arith.addf %9, %11 : vector<128x128xf32>
    %cst_11 = arith.constant 0.000000e+00 : f32
    %13 = vector.broadcast %cst_11 : f32 to vector<128x128xf32>
    %14 = arith.maximumf %12, %13 : vector<128x128xf32>
    %c0_12 = arith.constant 0 : index
    %c0_13 = arith.constant 0 : index
    %15 = vector.load %arg6[%c0_12, %c0_13] : memref<128x128xf32, #tpu.memory_space<vmem>>, vector<128x128xf32>
    %cst_14 = arith.constant dense<0.000000e+00> : vector<128x128xf32>
    %16 = tpu.matmul %14, %15, %cst_14 {dimension_numbers = #tpu.dot_dimension_numbers<[1], [0], [0], [1], [0, 0, 1, 1], [], []>} : vector<128x128xf32>, vector<128x128xf32>, vector<128x128xf32> -> vector<128x128xf32>
    %c0_15 = arith.constant 0 : index
    %c0_16 = arith.constant 0 : index
    %17 = vector.load %arg7[%c0_15, %c0_16] : memref<1x128xf32, #tpu.memory_space<vmem>>, vector<1x128xf32>
    %18 = vector.broadcast %17 : vector<1x128xf32> to vector<128x128xf32>
    %19 = arith.addf %16, %18 : vector<128x128xf32>
    %cst_17 = arith.constant 0.000000e+00 : f32
    %20 = vector.broadcast %cst_17 : f32 to vector<128x128xf32>
    %21 = arith.maximumf %19, %20 : vector<128x128xf32>
    %c0_18 = arith.constant 0 : index
    %c0_19 = arith.constant 0 : index
    %22 = vector.load %arg8[%c0_18, %c0_19] : memref<128x128xf32, #tpu.memory_space<vmem>>, vector<128x128xf32>
    %cst_20 = arith.constant dense<0.000000e+00> : vector<128x128xf32>
    %23 = tpu.matmul %21, %22, %cst_20 {dimension_numbers = #tpu.dot_dimension_numbers<[1], [0], [0], [1], [0, 0, 1, 1], [], []>} : vector<128x128xf32>, vector<128x128xf32>, vector<128x128xf32> -> vector<128x128xf32>
    %c0_21 = arith.constant 0 : index
    %c0_22 = arith.constant 0 : index
    %24 = vector.load %arg9[%c0_21, %c0_22] : memref<1x128xf32, #tpu.memory_space<vmem>>, vector<1x128xf32>
    %25 = vector.broadcast %24 : vector<1x128xf32> to vector<128x128xf32>
    %26 = arith.addf %23, %25 : vector<128x128xf32>
    %cst_23 = arith.constant 0.000000e+00 : f32
    %27 = vector.broadcast %cst_23 : f32 to vector<128x128xf32>
    %28 = arith.maximumf %26, %27 : vector<128x128xf32>
    %c0_24 = arith.constant 0 : index
    %c0_25 = arith.constant 0 : index
    %29 = vector.load %arg10[%c0_24, %c0_25] : memref<128x128xf32, #tpu.memory_space<vmem>>, vector<128x128xf32>
    %cst_26 = arith.constant dense<0.000000e+00> : vector<128x128xf32>
    %30 = tpu.matmul %28, %29, %cst_26 {dimension_numbers = #tpu.dot_dimension_numbers<[1], [0], [0], [1], [0, 0, 1, 1], [], []>} : vector<128x128xf32>, vector<128x128xf32>, vector<128x128xf32> -> vector<128x128xf32>
    %c0_27 = arith.constant 0 : index
    %c0_28 = arith.constant 0 : index
    %31 = vector.load %arg11[%c0_27, %c0_28] : memref<1x128xf32, #tpu.memory_space<vmem>>, vector<1x128xf32>
    %32 = vector.broadcast %31 : vector<1x128xf32> to vector<128x128xf32>
    %33 = arith.addf %30, %32 : vector<128x128xf32>
    %cst_29 = arith.constant 0.000000e+00 : f32
    %34 = vector.broadcast %cst_29 : f32 to vector<128x128xf32>
    %35 = arith.maximumf %33, %34 : vector<128x128xf32>
    %c0_30 = arith.constant 0 : index
    %c0_31 = arith.constant 0 : index
    %36 = vector.load %arg12[%c0_30, %c0_31] : memref<128x128xf32, #tpu.memory_space<vmem>>, vector<128x128xf32>
    tpu.vector_store %arg12[%c0_30, %c0_31], %35 {strides = array<i32>} : memref<128x128xf32, #tpu.memory_space<vmem>>, vector<128x128xf32>,
    return
  }
  func.func @transform_0(%arg0: i32) -> (i32, i32) {
    %c0_i32 = arith.constant 0 : i32
    %c0_i32_0 = arith.constant 0 : i32
    return %arg0, %c0_i32 : i32, i32
  }
  func.func @transform_1(%arg0: i32) -> (i32, i32) {
    %c0_i32 = arith.constant 0 : i32
    %c0_i32_0 = arith.constant 0 : i32
    %c0_i32_1 = arith.constant 0 : i32
    return %c0_i32, %c0_i32_0 : i32, i32
  }
  func.func @transform_2(%arg0: i32) -> (i32, i32) {
    %c0_i32 = arith.constant 0 : i32
    %c0_i32_0 = arith.constant 0 : i32
    %c0_i32_1 = arith.constant 0 : i32
    return %c0_i32, %c0_i32_0 : i32, i32
  }
  func.func @transform_3(%arg0: i32) -> (i32, i32) {
    %c0_i32 = arith.constant 0 : i32
    %c0_i32_0 = arith.constant 0 : i32
    %c0_i32_1 = arith.constant 0 : i32
    return %c0_i32, %c0_i32_0 : i32, i32
  }
  func.func @transform_4(%arg0: i32) -> (i32, i32) {
    %c0_i32 = arith.constant 0 : i32
    %c0_i32_0 = arith.constant 0 : i32
    %c0_i32_1 = arith.constant 0 : i32
    return %c0_i32, %c0_i32_0 : i32, i32
  }
  func.func @transform_5(%arg0: i32) -> (i32, i32) {
    %c0_i32 = arith.constant 0 : i32
    %c0_i32_0 = arith.constant 0 : i32
    %c0_i32_1 = arith.constant 0 : i32
    return %c0_i32, %c0_i32_0 : i32, i32
  }
  func.func @transform_6(%arg0: i32) -> (i32, i32) {
    %c0_i32 = arith.constant 0 : i32
    %c0_i32_0 = arith.constant 0 : i32
    %c0_i32_1 = arith.constant 0 : i32
    return %c0_i32, %c0_i32_0 : i32, i32
  }
  func.func @transform_7(%arg0: i32) -> (i32, i32) {
    %c0_i32 = arith.constant 0 : i32
    %c0_i32_0 = arith.constant 0 : i32
    %c0_i32_1 = arith.constant 0 : i32
    return %c0_i32, %c0_i32_0 : i32, i32
  }
  func.func @transform_8(%arg0: i32) -> (i32, i32) {
    %c0_i32 = arith.constant 0 : i32
    %c0_i32_0 = arith.constant 0 : i32
    %c0_i32_1 = arith.constant 0 : i32
    return %c0_i32, %c0_i32_0 : i32, i32
  }
  func.func @transform_9(%arg0: i32) -> (i32, i32) {
    %c0_i32 = arith.constant 0 : i32
    %c0_i32_0 = arith.constant 0 : i32
    %c0_i32_1 = arith.constant 0 : i32
    return %c0_i32, %c0_i32_0 : i32, i32
  }
  func.func @transform_10(%arg0: i32) -> (i32, i32) {
    %c0_i32 = arith.constant 0 : i32
    %c0_i32_0 = arith.constant 0 : i32
    %c0_i32_1 = arith.constant 0 : i32
    return %c0_i32, %c0_i32_0 : i32, i32
  }
  func.func @transform_11(%arg0: i32) -> (i32, i32) {
    %c0_i32 = arith.constant 0 : i32
    %c0_i32_0 = arith.constant 0 : i32
    return %arg0, %c0_i32 : i32, i32
  }
}

</mosaic_0001>

<llo_original>
// kernel: tpu_custom_call.1
$region0: #{tpu_custom_call.1}
  #allocation0 [shape = 'u32[]', space=smem, size = 0x4, offset = 0x4, fixed_abs, tag = 'smem constant byte address 0x4 - core index']
  #allocation1 [shape = 'u32[144,128]{1,0:T(1,128)}', space=vmem, size = 0x12000, scoped, tag = 'internal scratch']
  %s0 = inlined_call_operand.vmem [shape: f32[256,64], index: 0, kind: input, shape index: {}]
  %s1 = inlined_call_operand.vmem [shape: f32[64,256], index: 1, kind: input, shape index: {}]
  %s2 = inlined_call_operand.vmem [shape: f32[1,256], index: 2, kind: input, shape index: {}]
  %s3 = inlined_call_operand.vmem [shape: f32[256,128], index: 3, kind: input, shape index: {}]
  %s4 = inlined_call_operand.vmem [shape: f32[1,128], index: 4, kind: input, shape index: {}]
  %s5 = inlined_call_operand.hbm [shape: f32[128,128], index: 5, kind: input, shape index: {}]
  %s6 = inlined_call_operand.vmem [shape: f32[1,128], index: 6, kind: input, shape index: {}]
  %s7 = inlined_call_operand.hbm [shape: f32[128,128], index: 7, kind: input, shape index: {}]
  %s8 = inlined_call_operand.vmem [shape: f32[1,128], index: 8, kind: input, shape index: {}]
  %s9 = inlined_call_operand.hbm [shape: f32[128,128], index: 9, kind: input, shape index: {}]
  %s10 = inlined_call_operand.vmem [shape: f32[1,128], index: 10, kind: input, shape index: {}]
  %s11 = inlined_call_operand.hbm [shape: f32[256,128], index: 11, kind: output, shape index: {}]
  %s12 = sld [smem:[#allocation0]]
  $region89: #{tpu_custom_call.1} parent=0
    _
  %s14 = ssub.s32 1, %s12
  %s15 = scalar_select 0, %s14, %s12
  $region1: #{tpu_custom_call.1} parent=0
    #allocation2 [shape = 'u8[65536]{0}', space=vmem, size = 0x10000, scoped, tag = 'input window, operand 5, single buffered']
    #allocation3 [shape = 's32[2]{0}', space=sflag, size = 0x8, scoped, tag = 'scoped memory for tpu_custom_call.1']
    #allocation4 [shape = 's32[2]{0}', space=sflag, size = 0x8, scoped, tag = 'scoped memory for tpu_custom_call.1']
    #allocation5 [shape = 'u8[65536]{0}', space=vmem, size = 0x10000, scoped, tag = 'input window, operand 7, single buffered']
    #allocation6 [shape = 's32[1]{0}', space=sflag, size = 0x4, scoped, tag = 'scoped memory for tpu_custom_call.1']
    #allocation7 [shape = 'u8[65536]{0}', space=vmem, size = 0x10000, scoped, tag = 'input window, operand 9, single buffered']
    #allocation8 [shape = 'u8[131072]{0}', space=vmem, size = 0x20000, scoped, tag = 'output window, operand 0']
    %16 = vsyncpa [#allocation3], 0
    %17 = vsyncpa [#allocation6], 0
    %18 = vsyncpa [#allocation4], 0
    %s19 = scalar_lea.sflag [#allocation4], 1
    %20 = vsyncpa %s19, 0
    loop: start=0, step=1, limit=4
    $region2: #{tpu_custom_call.1} parent=1 // loop_pre_header
      _
    $region3: #{tpu_custom_call.1} parent=1 // loop_header
      %s22 = sphi 0, %s26
      %p23 = scmp.ge.s32.totalorder %s22, 4
      %s32 = sphi 0, %s34
      %s35 = sphi 0, %s32
      %s36 = sphi 0, %s35
      %s52 = sphi 0, %s36
      %s56 = sphi 0, %s56
      %s58 = sphi 0, %s56
      %s59 = sphi 0, %s58
      %s73 = sphi 0, %s59
      %s77 = sphi 0, %s77
      %s79 = sphi 0, %s77
      %s80 = sphi 0, %s79
      %s94 = sphi 0, %s80
      %s98 = sphi 0, %s98
      %s100 = sphi 0, %s98
      %s101 = sphi 0, %s100
      %s115 = sphi 0, %s101
      %s119 = sphi 0, %s119
      %s121 = sphi 0, %s119
      %s122 = sphi 0, %s121
      %s136 = sphi 0, %s122
      %s140 = sphi 0, %s140
      %s142 = sphi 0, %s140
      %s143 = sphi 0, %s142
      %s157 = sphi 0, %s143
      %s161 = sphi 0, %s161
      %s163 = sphi 0, %s161
      %s164 = sphi 0, %s163
      %s178 = sphi 0, %s164
      %s182 = sphi 0, %s182
      %s184 = sphi 0, %s182
      %s185 = sphi 0, %s184
      %s199 = sphi 0, %s185
      %s203 = sphi 0, %s203
      %s205 = sphi 0, %s203
      %s206 = sphi 0, %s205
      %s220 = sphi 0, %s206
      %s224 = sphi 0, %s224
      %s226 = sphi 0, %s224
      %s227 = sphi 0, %s226
      %s241 = sphi 0, %s227
      %s245 = sphi 0, %s245
      %s247 = sphi 0, %s245
      %s248 = sphi 0, %s247
      %s262 = sphi 0, %s248
      %s268 = sphi 0, %s270
      %s271 = sphi 0, %s268
      %s272 = sphi 0, %s271
      %s288 = sphi 0, %s272
    $region4: #{tpu_custom_call.1} parent=1 // loop_header_branch
      %25 = sbr.rel (%p23) target = $region8
    $region5: #{tpu_custom_call.1} parent=1 // loop_body
      %s27 = ssub.s32 %s22, 1
      %s28 = ssub.s32 %s22, 2
      %s29 = sadd.s32 %s22, 1
      %s30 = ssub.s32 %s22, %s29
      %p31 = scmp.eq.s32.totalorder %s30, 0
      %s33 = sadd.s32 %s32, 1
      %s34 = scalar_select %p31, %s32, %s33
      %p37 = pneg %p31
      %p38 = scmp.eq.s32.totalorder %s22, 1
      %p39 = por %p37, %p38
      %p40 = scmp.ne.s32.totalorder %s32, %s35
      %p41 = scmp.eq.s32.totalorder %s22, 0
      %p42 = por %p40, %p41
      %p43 = scmp.ne.s32.totalorder %s32, %s35
      %p44 = scmp.eq.s32.totalorder %s27, 1
      %p45 = por %p43, %p44
      %p46 = scmp.ne.s32.totalorder %s35, %s36
      %p47 = scmp.eq.s32.totalorder %s27, 0
      %p48 = por %p46, %p47
      %p49 = scmp.ne.s32.totalorder %s35, %s36
      %p50 = scmp.eq.s32.totalorder %s28, 1
      %p51 = por %p49, %p50
      %p53 = scmp.ne.s32.totalorder %s36, %s52
      %p54 = scmp.eq.s32.totalorder %s28, 0
      %p55 = por %p53, %p54
      %s57 = sadd.s32 %s56, 1
      %p60 = scmp.eq.s32.totalorder %s22, 1
      %p61 = scmp.ne.s32.totalorder %s56, %s58
      %p62 = scmp.eq.s32.totalorder %s22, 0
      %p63 = por %p61, %p62
      %p64 = scmp.ne.s32.totalorder %s56, %s58
      %p65 = scmp.eq.s32.totalorder %s27, 1
      %p66 = por %p64, %p65
      %p67 = scmp.ne.s32.totalorder %s58, %s59
      %p68 = scmp.eq.s32.totalorder %s27, 0
      %p69 = por %p67, %p68
      %p70 = scmp.ne.s32.totalorder %s58, %s59
      %p71 = scmp.eq.s32.totalorder %s28, 1
      %p72 = por %p70, %p71
      %p74 = scmp.ne.s32.totalorder %s59, %s73
      %p75 = scmp.eq.s32.totalorder %s28, 0
      %p76 = por %p74, %p75
      %s78 = sadd.s32 %s77, 1
      %p81 = scmp.eq.s32.totalorder %s22, 1
      %p82 = scmp.ne.s32.totalorder %s77, %s79
      %p83 = scmp.eq.s32.totalorder %s22, 0
      %p84 = por %p82, %p83
      %p85 = scmp.ne.s32.totalorder %s77, %s79
      %p86 = scmp.eq.s32.totalorder %s27, 1
      %p87 = por %p85, %p86
      %p88 = scmp.ne.s32.totalorder %s79, %s80
      %p89 = scmp.eq.s32.totalorder %s27, 0
      %p90 = por %p88, %p89
      %p91 = scmp.ne.s32.totalorder %s79, %s80
      %p92 = scmp.eq.s32.totalorder %s28, 1
      %p93 = por %p91, %p92
      %p95 = scmp.ne.s32.totalorder %s80, %s94
      %p96 = scmp.eq.s32.totalorder %s28, 0
      %p97 = por %p95, %p96
      %s99 = sadd.s32 %s98, 1
      %p102 = scmp.eq.s32.totalorder %s22, 1
      %p103 = scmp.ne.s32.totalorder %s98, %s100
      %p104 = scmp.eq.s32.totalorder %s22, 0
      %p105 = por %p103, %p104
      %p106 = scmp.ne.s32.totalorder %s98, %s100
      %p107 = scmp.eq.s32.totalorder %s27, 1
      %p108 = por %p106, %p107
      %p109 = scmp.ne.s32.totalorder %s100, %s101
      %p110 = scmp.eq.s32.totalorder %s27, 0
      %p111 = por %p109, %p110
      %p112 = scmp.ne.s32.totalorder %s100, %s101
      %p113 = scmp.eq.s32.totalorder %s28, 1
      %p114 = por %p112, %p113
      %p116 = scmp.ne.s32.totalorder %s101, %s115
      %p117 = scmp.eq.s32.totalorder %s28, 0
      %p118 = por %p116, %p117
      %s120 = sadd.s32 %s119, 1
      %p123 = scmp.eq.s32.totalorder %s22, 1
      %p124 = scmp.ne.s32.totalorder %s119, %s121
      %p125 = scmp.eq.s32.totalorder %s22, 0
      %p126 = por %p124, %p125
      %p127 = scmp.ne.s32.totalorder %s119, %s121
      %p128 = scmp.eq.s32.totalorder %s27, 1
      %p129 = por %p127, %p128
      %p130 = scmp.ne.s32.totalorder %s121, %s122
      %p131 = scmp.eq.s32.totalorder %s27, 0
      %p132 = por %p130, %p131
      %p133 = scmp.ne.s32.totalorder %s121, %s122
      %p134 = scmp.eq.s32.totalorder %s28, 1
      %p135 = por %p133, %p134
      %p137 = scmp.ne.s32.totalorder %s122, %s136
      %p138 = scmp.eq.s32.totalorder %s28, 0
      %p139 = por %p137, %p138
      %s141 = sadd.s32 %s140, 1
      %p144 = scmp.eq.s32.totalorder %s22, 1
      %p145 = scmp.ne.s32.totalorder %s140, %s142
      %p146 = scmp.eq.s32.totalorder %s22, 0
      %p147 = por %p145, %p146
      %p148 = scmp.ne.s32.totalorder %s140, %s142
      %p149 = scmp.eq.s32.totalorder %s27, 1
      %p150 = por %p148, %p149
      %p151 = scmp.ne.s32.totalorder %s142, %s143
      %p152 = scmp.eq.s32.totalorder %s27, 0
      %p153 = por %p151, %p152
      %p154 = scmp.ne.s32.totalorder %s142, %s143
      %p155 = scmp.eq.s32.totalorder %s28, 1
      %p156 = por %p154, %p155
      %p158 = scmp.ne.s32.totalorder %s143, %s157
      %p159 = scmp.eq.s32.totalorder %s28, 0
      %p160 = por %p158, %p159
      %s162 = sadd.s32 %s161, 1
      %p165 = scmp.eq.s32.totalorder %s22, 1
      %p166 = scmp.ne.s32.totalorder %s161, %s163
      %p167 = scmp.eq.s32.totalorder %s22, 0
      %p168 = por %p166, %p167
      %p169 = scmp.ne.s32.totalorder %s161, %s163
      %p170 = scmp.eq.s32.totalorder %s27, 1
      %p171 = por %p169, %p170
      %p172 = scmp.ne.s32.totalorder %s163, %s164
      %p173 = scmp.eq.s32.totalorder %s27, 0
      %p174 = por %p172, %p173
      %p175 = scmp.ne.s32.totalorder %s163, %s164
      %p176 = scmp.eq.s32.totalorder %s28, 1
      %p177 = por %p175, %p176
      %p179 = scmp.ne.s32.totalorder %s164, %s178
      %p180 = scmp.eq.s32.totalorder %s28, 0
      %p181 = por %p179, %p180
      %s183 = sadd.s32 %s182, 1
      %p186 = scmp.eq.s32.totalorder %s22, 1
      %p187 = scmp.ne.s32.totalorder %s182, %s184
      %p188 = scmp.eq.s32.totalorder %s22, 0
      %p189 = por %p187, %p188
      %p190 = scmp.ne.s32.totalorder %s182, %s184
      %p191 = scmp.eq.s32.totalorder %s27, 1
      %p192 = por %p190, %p191
      %p193 = scmp.ne.s32.totalorder %s184, %s185
      %p194 = scmp.eq.s32.totalorder %s27, 0
      %p195 = por %p193, %p194
      %p196 = scmp.ne.s32.totalorder %s184, %s185
      %p197 = scmp.eq.s32.totalorder %s28, 1
      %p198 = por %p196, %p197
      %p200 = scmp.ne.s32.totalorder %s185, %s199
      %p201 = scmp.eq.s32.totalorder %s28, 0
      %p202 = por %p200, %p201
      %s204 = sadd.s32 %s203, 1
      %p207 = scmp.eq.s32.totalorder %s22, 1
      %p208 = scmp.ne.s32.totalorder %s203, %s205
      %p209 = scmp.eq.s32.totalorder %s22, 0
      %p210 = por %p208, %p209
      %p211 = scmp.ne.s32.totalorder %s203, %s205
      %p212 = scmp.eq.s32.totalorder %s27, 1
      %p213 = por %p211, %p212
      %p214 = scmp.ne.s32.totalorder %s205, %s206
      %p215 = scmp.eq.s32.totalorder %s27, 0
      %p216 = por %p214, %p215
      %p217 = scmp.ne.s32.totalorder %s205, %s206
      %p218 = scmp.eq.s32.totalorder %s28, 1
      %p219 = por %p217, %p218
      %p221 = scmp.ne.s32.totalorder %s206, %s220
      %p222 = scmp.eq.s32.totalorder %s28, 0
      %p223 = por %p221, %p222
      %s225 = sadd.s32 %s224, 1
      %p228 = scmp.eq.s32.totalorder %s22, 1
      %p229 = scmp.ne.s32.totalorder %s224, %s226
      %p230 = scmp.eq.s32.totalorder %s22, 0
      %p231 = por %p229, %p230
      %p232 = scmp.ne.s32.totalorder %s224, %s226
      %p233 = scmp.eq.s32.totalorder %s27, 1
      %p234 = por %p232, %p233
      %p235 = scmp.ne.s32.totalorder %s226, %s227
      %p236 = scmp.eq.s32.totalorder %s27, 0
      %p237 = por %p235, %p236
      %p238 = scmp.ne.s32.totalorder %s226, %s227
      %p239 = scmp.eq.s32.totalorder %s28, 1
      %p240 = por %p238, %p239
      %p242 = scmp.ne.s32.totalorder %s227, %s241
      %p243 = scmp.eq.s32.totalorder %s28, 0
      %p244 = por %p242, %p243
      %s246 = sadd.s32 %s245, 1
      %p249 = scmp.eq.s32.totalorder %s22, 1
      %p250 = scmp.ne.s32.totalorder %s245, %s247
      %p251 = scmp.eq.s32.totalorder %s22, 0
      %p252 = por %p250, %p251
      %p253 = scmp.ne.s32.totalorder %s245, %s247
      %p254 = scmp.eq.s32.totalorder %s27, 1
      %p255 = por %p253, %p254
      %p256 = scmp.ne.s32.totalorder %s247, %s248
      %p257 = scmp.eq.s32.totalorder %s27, 0
      %p258 = por %p256, %p257
      %p259 = scmp.ne.s32.totalorder %s247, %s248
      %p260 = scmp.eq.s32.totalorder %s28, 1
      %p261 = por %p259, %p260
      %p263 = scmp.ne.s32.totalorder %s248, %s262
      %p264 = scmp.eq.s32.totalorder %s28, 0
      %p265 = por %p263, %p264
      %s266 = ssub.s32 %s22, %s29
      %p267 = scmp.eq.s32.totalorder %s266, 0
      %s269 = sadd.s32 %s268, 1
      %s270 = scalar_select %p267, %s268, %s269
      %p273 = pneg %p267
      %p274 = scmp.eq.s32.totalorder %s22, 1
      %p275 = por %p273, %p274
      %p276 = scmp.ne.s32.totalorder %s268, %s271
      %p277 = scmp.eq.s32.totalorder %s22, 0
      %p278 = por %p276, %p277
      %p279 = scmp.ne.s32.totalorder %s268, %s271
      %p280 = scmp.eq.s32.totalorder %s27, 1
      %p281 = por %p279, %p280
      %p282 = scmp.ne.s32.totalorder %s271, %s272
      %p283 = scmp.eq.s32.totalorder %s27, 0
      %p284 = por %p282, %p283
      %p285 = scmp.ne.s32.totalorder %s271, %s272
      %p286 = scmp.eq.s32.totalorder %s28, 1
      %p287 = por %p285, %p286
      %p289 = scmp.ne.s32.totalorder %s272, %s288
      %p290 = scmp.eq.s32.totalorder %s28, 0
      %p291 = por %p289, %p290
      %p292 = scmp.le.s32.totalorder 1, %s22
      %p293 = scmp.lt.s32.totalorder %s22, 3
      %p294 = pnand %p292, %p293
      %p295 = pneg %p294
      // Predicated region
      $region9: #{tpu_custom_call.1} parent=5 // pred_check
        _
      $region10: #{tpu_custom_call.1} parent=5 // pred_check_branch
        %297 = sbr.rel (%p294) target = $region12
      $region11: #{tpu_custom_call.1} parent=5 // pred_region
        %s298 = ssub.s32 %s22, 1
        // Predicated region
        $region13: #{tpu_custom_call.1} parent=11 // pred_check
          %p299 = pneg %p69
        $region14: #{tpu_custom_call.1} parent=11 // pred_check_branch
          %301 = sbr.rel (%p299) target = $region16
        $region15: #{tpu_custom_call.1} parent=11 // pred_region
          _
        $region16: #{tpu_custom_call.1} parent=11 // pred_fallthru
          _
        // Predicated region
        $region17: #{tpu_custom_call.1} parent=11 // pred_check
          %p302 = pneg %p90
        $region18: #{tpu_custom_call.1} parent=11 // pred_check_branch
          %304 = sbr.rel (%p302) target = $region20
        $region19: #{tpu_custom_call.1} parent=11 // pred_region
          _
        $region20: #{tpu_custom_call.1} parent=11 // pred_fallthru
          _
        // Predicated region
        $region21: #{tpu_custom_call.1} parent=11 // pred_check
          %p305 = pneg %p111
        $region22: #{tpu_custom_call.1} parent=11 // pred_check_branch
          %307 = sbr.rel (%p305) target = $region24
        $region23: #{tpu_custom_call.1} parent=11 // pred_region
          _
        $region24: #{tpu_custom_call.1} parent=11 // pred_fallthru
          _
        // Predicated region
        $region25: #{tpu_custom_call.1} parent=11 // pred_check
          %p308 = pneg %p132
        $region26: #{tpu_custom_call.1} parent=11 // pred_check_branch
          %310 = sbr.rel (%p308) target = $region28
        $region27: #{tpu_custom_call.1} parent=11 // pred_region
          _
        $region28: #{tpu_custom_call.1} parent=11 // pred_fallthru
          _
        // Predicated region
        $region29: #{tpu_custom_call.1} parent=11 // pred_check
          %p311 = pneg %p153
        $region30: #{tpu_custom_call.1} parent=11 // pred_check_branch
          %313 = sbr.rel (%p311) target = $region32
        $region31: #{tpu_custom_call.1} parent=11 // pred_region
          %s315 = ssub.s32 2048, 2048
          %316 = vsyncadd [#allocation3], %s315
          %s317 = sshll.u32 [#allocation2], 4
          %s318 = int_to_ptr.vmem [resolvable:$true] %s317
          %323 = dma.hbm_to_vmem [thread:$0]  %s5, 2048, %s318, [#allocation3], 128, 128, 8
        $region32: #{tpu_custom_call.1} parent=11 // pred_fallthru
          _
        // Predicated region
        $region33: #{tpu_custom_call.1} parent=11 // pred_check
          %p324 = pneg %p174
        $region34: #{tpu_custom_call.1} parent=11 // pred_check_branch
          %326 = sbr.rel (%p324) target = $region36
        $region35: #{tpu_custom_call.1} parent=11 // pred_region
          _
        $region36: #{tpu_custom_call.1} parent=11 // pred_fallthru
          _
        // Predicated region
        $region37: #{tpu_custom_call.1} parent=11 // pred_check
          %p327 = pneg %p195
        $region38: #{tpu_custom_call.1} parent=11 // pred_check_branch
          %329 = sbr.rel (%p327) target = $region40
        $region39: #{tpu_custom_call.1} parent=11 // pred_region
          %s331 = ssub.s32 2048, 2048
          %332 = vsyncadd [#allocation6], %s331
          %s333 = sshll.u32 [#allocation5], 4
          %s334 = int_to_ptr.vmem [resolvable:$true] %s333
          %339 = dma.hbm_to_vmem [thread:$0]  %s7, 2048, %s334, [#allocation6], 128, 128, 8
        $region40: #{tpu_custom_call.1} parent=11 // pred_fallthru
          _
        // Predicated region
        $region41: #{tpu_custom_call.1} parent=11 // pred_check
          %p340 = pneg %p216
        $region42: #{tpu_custom_call.1} parent=11 // pred_check_branch
          %342 = sbr.rel (%p340) target = $region44
        $region43: #{tpu_custom_call.1} parent=11 // pred_region
          _
        $region44: #{tpu_custom_call.1} parent=11 // pred_fallthru
          _
        // Predicated region
        $region45: #{tpu_custom_call.1} parent=11 // pred_check
          %p343 = pneg %p237
        $region46: #{tpu_custom_call.1} parent=11 // pred_check_branch
          %345 = sbr.rel (%p343) target = $region48
        $region47: #{tpu_custom_call.1} parent=11 // pred_region
          %s347 = ssub.s32 2048, 2048
          %348 = vsyncadd [#allocation6], %s347
          %s349 = sshll.u32 [#allocation7], 4
          %s350 = int_to_ptr.vmem [resolvable:$true] %s349
          %355 = dma.hbm_to_vmem [thread:$0]  %s9, 2048, %s350, [#allocation6], 128, 128, 8
        $region48: #{tpu_custom_call.1} parent=11 // pred_fallthru
          _
        // Predicated region
        $region49: #{tpu_custom_call.1} parent=11 // pred_check
          %p356 = pneg %p258
        $region50: #{tpu_custom_call.1} parent=11 // pred_check_branch
          %358 = sbr.rel (%p356) target = $region52
        $region51: #{tpu_custom_call.1} parent=11 // pred_region
          _
        $region52: #{tpu_custom_call.1} parent=11 // pred_fallthru
          _
      $region12: #{tpu_custom_call.1} parent=5 // pred_fallthru
        _
      %p359 = scmp.lt.s32.totalorder %s22, 2
      // Predicated region
      $region53: #{tpu_custom_call.1} parent=5 // pred_check
        %p360 = pneg %p359
      $region54: #{tpu_custom_call.1} parent=5 // pred_check_branch
        %362 = sbr.rel (%p360) target = $region56
      $region55: #{tpu_custom_call.1} parent=5 // pred_region
        // Predicated region
        $region57: #{tpu_custom_call.1} parent=55 // pred_check
          %p363 = pneg %p42
        $region58: #{tpu_custom_call.1} parent=55 // pred_check_branch
          %365 = sbr.rel (%p363) target = $region60
        $region59: #{tpu_custom_call.1} parent=55 // pred_region
          %s366 = smul.u32 16, %s22
          %p367 = scmp.lt.s32.totalorder %s366, 31
          %s368 = scalar_select %p367, %s366, 31
          %s369 = smul.addr %s368, 8
          %s370 = scalar_lea.vmem %s0, %s369
          %s371 = smul.u32 16, %s22
        $region60: #{tpu_custom_call.1} parent=55 // pred_fallthru
          _
      $region56: #{tpu_custom_call.1} parent=5 // pred_fallthru
        _
      %p372 = scmp.le.s32.totalorder 1, %s22
      %p373 = scmp.lt.s32.totalorder %s22, 3
      %p374 = pnand %p372, %p373
      %p375 = pneg %p374
      // Predicated region
      $region61: #{tpu_custom_call.1} parent=5 // pred_check
        _
      $region62: #{tpu_custom_call.1} parent=5 // pred_check_branch
        %377 = sbr.rel (%p374) target = $region64
      $region63: #{tpu_custom_call.1} parent=5 // pred_region
        %s378 = ssub.s32 %s22, 1
        // Predicated region
        $region65: #{tpu_custom_call.1} parent=63 // pred_check
          %p379 = pneg %p153
        $region66: #{tpu_custom_call.1} parent=63 // pred_check_branch
          %381 = sbr.rel (%p379) target = $region68
        $region67: #{tpu_custom_call.1} parent=63 // pred_region
          %382 = dma.done [#allocation3], 2048
        $region68: #{tpu_custom_call.1} parent=63 // pred_fallthru
          _
        // Predicated region
        $region69: #{tpu_custom_call.1} parent=63 // pred_check
          %p383 = pneg %p195
        $region70: #{tpu_custom_call.1} parent=63 // pred_check_branch
          %385 = sbr.rel (%p383) target = $region72
        $region71: #{tpu_custom_call.1} parent=63 // pred_region
          %386 = dma.done [#allocation6], 2048
        $region72: #{tpu_custom_call.1} parent=63 // pred_fallthru
          _
        // Predicated region
        $region73: #{tpu_custom_call.1} parent=63 // pred_check
          %p387 = pneg %p237
        $region74: #{tpu_custom_call.1} parent=63 // pred_check_branch
          %389 = sbr.rel (%p387) target = $region76
        $region75: #{tpu_custom_call.1} parent=63 // pred_region
          %390 = dma.done [#allocation6], 2048
        $region76: #{tpu_custom_call.1} parent=63 // pred_fallthru
          _
        %s391 = smul.u32 16, %s27
        %p392 = scmp.lt.s32.totalorder %s391, 31
        %s393 = scalar_select %p392, %s391, 31
        %s394 = smul.addr %s393, 8
        %s395 = scalar_lea.vmem %s0, %s394
        %p396 = pneg %p48
        %p397 = pneg %p45
        %p398 = pneg %p69
        %p399 = pneg %p66
        %p400 = pneg %p90
        %p401 = pneg %p87
        %p402 = pneg %p111
        %p403 = pneg %p108
        %p404 = pneg %p132
        %p405 = pneg %p129
        %p406 = pneg %p153
        %p407 = pneg %p150
        %p408 = pneg %p174
        %p409 = pneg %p171
        %p410 = pneg %p195
        %p411 = pneg %p192
        %p412 = pneg %p216
        %p413 = pneg %p213
        %p414 = pneg %p237
        %p415 = pneg %p234
        %p416 = pneg %p258
        %p417 = pneg %p255
        %p418 = pneg %p284
        %p419 = pneg %p281
        %s420 = sand.u32 %s271, 1
        %s421 = scalar_lea.sflag [#allocation4], %s420
        %s422 = sand.u32 %s271, 1
        %s423 = smul.addr %s422, 128
        %s424 = scalar_lea.vmem [#allocation8], %s423
        %s425 = smul.u32 16, %s27
        %p426 = scmp.lt.s32.totalorder %s425, 31
        %s427 = scalar_select %p426, %s425, 31
        %s428 = smul.addr %s427, 8
        %s429 = scalar_lea.vmem %s0, %s428
        %s430 = smul.u32 16, %s27
        %s431 = smul.u32 16, %s27
        %v432 = vld [vmem:[%s429] sm:$0xff]
        %v433 = vld [vmem:[%s429 + $0x8] sm:$0xff]
        %v434 = vld [vmem:[%s429 + $0x10] sm:$0xff]
        %v435 = vld [vmem:[%s429 + $0x18] sm:$0xff]
        %v436 = vld [vmem:[%s429 + $0x20] sm:$0xff]
        %v437 = vld [vmem:[%s429 + $0x28] sm:$0xff]
        %v438 = vld [vmem:[%s429 + $0x30] sm:$0xff]
        %v439 = vld [vmem:[%s429 + $0x38] sm:$0xff]
        %v440 = vld [vmem:[%s429 + $0x40] sm:$0xff]
        %v441 = vld [vmem:[%s429 + $0x48] sm:$0xff]
        %v442 = vld [vmem:[%s429 + $0x50] sm:$0xff]
        %v443 = vld [vmem:[%s429 + $0x58] sm:$0xff]
        %v444 = vld [vmem:[%s429 + $0x60] sm:$0xff]
        %v445 = vld [vmem:[%s429 + $0x68] sm:$0xff]
        %v446 = vld [vmem:[%s429 + $0x70] sm:$0xff]
        %v447 = vld [vmem:[%s429 + $0x78] sm:$0xff]
        %v448 = vld [vmem:[%s1] sm:$0xff]
        %v449 = vld [vmem:[%s1 + $0x8] sm:$0xff]
        %v450 = vld [vmem:[%s1 + $0x10] sm:$0xff]
        %v451 = vld [vmem:[%s1 + $0x18] sm:$0xff]
        %v452 = vld [vmem:[%s1 + $0x20] sm:$0xff]
        %v453 = vld [vmem:[%s1 + $0x28] sm:$0xff]
        %v454 = vld [vmem:[%s1 + $0x30] sm:$0xff]
        %v455 = vld [vmem:[%s1 + $0x38] sm:$0xff]
        %v456 = vld [vmem:[%s1 + $0x40] sm:$0xff]
        %v457 = vld [vmem:[%s1 + $0x48] sm:$0xff]
        %v458 = vld [vmem:[%s1 + $0x50] sm:$0xff]
        %v459 = vld [vmem:[%s1 + $0x58] sm:$0xff]
        %v460 = vld [vmem:[%s1 + $0x60] sm:$0xff]
        %v461 = vld [vmem:[%s1 + $0x68] sm:$0xff]
        %v462 = vld [vmem:[%s1 + $0x70] sm:$0xff]
        %v463 = vld [vmem:[%s1 + $0x78] sm:$0xff]
        %v464 = vld [vmem:[%s2] sm:$0x3]
        %v466 = vlaneseq
        %v467 = vshrl.u32 %v466, 7
        %v468 = vsub.s32 0, %v467
        %v469 = vrot.slane %v464, %v468
        %v470 = vlaneseq
        %v471 = vshrl.u32 %v470, 7
        %v472 = vsub.s32 1, %v471
        %v473 = vrot.slane %v464, %v472
        %vm476 = vcmask 523264
        %v478 = vsel %vm476, %v432, 0
        %v481 = vsel %vm476, %v433, 0
        %v484 = vsel %vm476, %v434, 0
        %v487 = vsel %vm476, %v435, 0
        %v490 = vsel %vm476, %v436, 0
        %v493 = vsel %vm476, %v437, 0
        %v496 = vsel %vm476, %v438, 0
        %v499 = vsel %vm476, %v439, 0
        %v502 = vsel %vm476, %v440, 0
        %v505 = vsel %vm476, %v441, 0
        %v508 = vsel %vm476, %v442, 0
        %v511 = vsel %vm476, %v443, 0
        %v514 = vsel %vm476, %v444, 0
        %v517 = vsel %vm476, %v445, 0
        %v520 = vsel %vm476, %v446, 0
        %v523 = vsel %vm476, %v447, 0
        %525 = vmatprep.subr.mxu0 %v449
        %526 = vmatpush1.msra.mxu0 %v448
        %527 = vmatprep.subr.mxu0 %v451
        %528 = vmatpush1.msra.mxu0 %v450
        %529 = vmatprep.subr.mxu0 %v453
        %530 = vmatpush1.msra.mxu0 %v452
        %531 = vmatprep.subr.mxu0 %v455
        %532 = vmatpush1.msra.mxu0 %v454
        %533 = vmatprep.subr.mxu0 %v457
        %534 = vmatpush1.msra.mxu0 %v456
        %535 = vmatprep.subr.mxu0 %v459
        %536 = vmatpush1.msra.mxu0 %v458
        %537 = vmatprep.subr.mxu0 %v461
        %538 = vmatpush1.msra.mxu0 %v460
        %539 = vmatprep.subr.mxu0 %v463
        %540 = vmatpush1.msra.mxu0 %v462
        %541 = vmatprep.subr.mxu0 0.0
        %542 = vmatpush1.msra.mxu0 0.0
        %543 = vmatprep.subr.mxu0 0.0
        %544 = vmatpush1.msra.mxu0 0.0
        %545 = vmatprep.subr.mxu0 0.0
        %546 = vmatpush1.msra.mxu0 0.0
        %547 = vmatprep.subr.mxu0 0.0
        %548 = vmatpush1.msra.mxu0 0.0
        %549 = vmatprep.subr.mxu0 0.0
        %550 = vmatpush1.msra.mxu0 0.0
        %551 = vmatprep.subr.mxu0 0.0
        %552 = vmatpush1.msra.mxu0 0.0
        %553 = vmatprep.subr.mxu0 0.0
        %554 = vmatpush1.msra.mxu0 0.0
        %555 = vmatprep.subr.mxu0 0.0
        %556 = vmatpush1.msra.mxu0 0.0
        %557 = vmatprep.subr.mxu0 0.0
        %558 = vmatpush1.msra.mxu0 0.0
        %559 = vmatprep.subr.mxu0 0.0
        %560 = vmatpush1.msra.mxu0 0.0
        %561 = vmatprep.subr.mxu0 0.0
        %562 = vmatpush1.msra.mxu0 0.0
        %563 = vmatprep.subr.mxu0 0.0
        %564 = vmatpush1.msra.mxu0 0.0
        %565 = vmatprep.subr.mxu0 0.0
        %566 = vmatpush1.msra.mxu0 0.0
        %567 = vmatprep.subr.mxu0 0.0
        %568 = vmatpush1.msra.mxu0 0.0
        %569 = vmatprep.subr.mxu0 0.0
        %570 = vmatpush1.msra.mxu0 0.0
        %571 = vmatprep.subr.mxu0 0.0
        %572 = vmatpush1.msra.mxu0 0.0
        %573 = vmatprep.subr.mxu0 0.0
        %574 = vmatpush1.msra.mxu0 0.0
        %575 = vmatprep.subr.mxu0 0.0
        %576 = vmatpush1.msra.mxu0 0.0
        %577 = vmatprep.subr.mxu0 0.0
        %578 = vmatpush1.msra.mxu0 0.0
        %579 = vmatprep.subr.mxu0 0.0
        %580 = vmatpush1.msra.mxu0 0.0
        %581 = vmatprep.subr.mxu0 0.0
        %582 = vmatpush1.msra.mxu0 0.0
        %583 = vmatprep.subr.mxu0 0.0
        %584 = vmatpush1.msra.mxu0 0.0
        %585 = vmatprep.subr.mxu0 0.0
        %586 = vmatpush1.msra.mxu0 0.0
        %587 = vmatprep.subr.mxu0 0.0
        %588 = vmatpush1.msra.mxu0 0.0
        %589 = vmatprep.mubr.f32.mxu0 0.0
        %590 = vmatmul.mubr.f32.gmra.mrb[0].mxu0 %v478
        %v591 = vpop.f32.mrb[0].mxu0
        %v592 = vadd.f32 %v469, %v591
        %v593 = vpop.f32.mrb[0].mxu0
        %v594 = vadd.f32 %v473, %v593
        %595 = vmatprep.mubr.f32.mxu0 0.0
        %596 = vmatmul.mubr.f32.gmra.mrb[0].mxu0 %v481
        %v597 = vpop.f32.mrb[0].mxu0
        %v598 = vadd.f32 %v469, %v597
        %v599 = vpop.f32.mrb[0].mxu0
        %v600 = vadd.f32 %v473, %v599
        %601 = vmatprep.mubr.f32.mxu0 0.0
        %602 = vmatmul.mubr.f32.gmra.mrb[0].mxu0 %v484
        %v603 = vpop.f32.mrb[0].mxu0
        %v604 = vadd.f32 %v469, %v603
        %v605 = vpop.f32.mrb[0].mxu0
        %v606 = vadd.f32 %v473, %v605
        %607 = vmatprep.mubr.f32.mxu0 0.0
        %608 = vmatmul.mubr.f32.gmra.mrb[0].mxu0 %v487
        %v609 = vpop.f32.mrb[0].mxu0
        %v610 = vadd.f32 %v469, %v609
        %v611 = vpop.f32.mrb[0].mxu0
        %v612 = vadd.f32 %v473, %v611
        %613 = vmatprep.mubr.f32.mxu0 0.0
        %614 = vmatmul.mubr.f32.gmra.mrb[0].mxu0 %v490
        %v615 = vpop.f32.mrb[0].mxu0
        %v616 = vadd.f32 %v469, %v615
        %v617 = vpop.f32.mrb[0].mxu0
        %v618 = vadd.f32 %v473, %v617
        %619 = vmatprep.mubr.f32.mxu0 0.0
        %620 = vmatmul.mubr.f32.gmra.mrb[0].mxu0 %v493
        %v621 = vpop.f32.mrb[0].mxu0
        %v622 = vadd.f32 %v469, %v621
        %v623 = vpop.f32.mrb[0].mxu0
        %v624 = vadd.f32 %v473, %v623
        %625 = vmatprep.mubr.f32.mxu0 0.0
        %626 = vmatmul.mubr.f32.gmra.mrb[0].mxu0 %v496
        %v627 = vpop.f32.mrb[0].mxu0
        %v628 = vadd.f32 %v469, %v627
        %v629 = vpop.f32.mrb[0].mxu0
        %v630 = vadd.f32 %v473, %v629
        %631 = vmatprep.mubr.f32.mxu0 0.0
        %632 = vmatmul.mubr.f32.gmra.mrb[0].mxu0 %v499
        %v633 = vpop.f32.mrb[0].mxu0
        %v634 = vadd.f32 %v469, %v633
        %v635 = vpop.f32.mrb[0].mxu0
        %v636 = vadd.f32 %v473, %v635
        %637 = vmatprep.mubr.f32.mxu0 0.0
        %638 = vmatmul.mubr.f32.gmra.mrb[0].mxu0 %v502
        %v639 = vpop.f32.mrb[0].mxu0
        %v640 = vadd.f32 %v469, %v639
        %v641 = vpop.f32.mrb[0].mxu0
        %v642 = vadd.f32 %v473, %v641
        %643 = vmatprep.mubr.f32.mxu0 0.0
        %644 = vmatmul.mubr.f32.gmra.mrb[0].mxu0 %v505
        %v645 = vpop.f32.mrb[0].mxu0
        %v646 = vadd.f32 %v469, %v645
        %v647 = vpop.f32.mrb[0].mxu0
        %v648 = vadd.f32 %v473, %v647
        %649 = vmatprep.mubr.f32.mxu0 0.0
        %650 = vmatmul.mubr.f32.gmra.mrb[0].mxu0 %v508
        %v651 = vpop.f32.mrb[0].mxu0
        %v652 = vadd.f32 %v469, %v651
        %v653 = vpop.f32.mrb[0].mxu0
        %v654 = vadd.f32 %v473, %v653
        %655 = vmatprep.mubr.f32.mxu0 0.0
        %656 = vmatmul.mubr.f32.gmra.mrb[0].mxu0 %v511
        %v657 = vpop.f32.mrb[0].mxu0
        %v658 = vadd.f32 %v469, %v657
        %v659 = vpop.f32.mrb[0].mxu0
        %v660 = vadd.f32 %v473, %v659
        %661 = vmatprep.mubr.f32.mxu0 0.0
        %662 = vmatmul.mubr.f32.gmra.mrb[0].mxu0 %v514
        %v663 = vpop.f32.mrb[0].mxu0
        %v664 = vadd.f32 %v469, %v663
        %v665 = vpop.f32.mrb[0].mxu0
        %v666 = vadd.f32 %v473, %v665
        %667 = vmatprep.mubr.f32.mxu0 0.0
        %668 = vmatmul.mubr.f32.gmra.mrb[0].mxu0 %v517
        %v669 = vpop.f32.mrb[0].mxu0
        %v670 = vadd.f32 %v469, %v669
        %v671 = vpop.f32.mrb[0].mxu0
        %v672 = vadd.f32 %v473, %v671
        %673 = vmatprep.mubr.f32.mxu0 0.0
        %674 = vmatmul.mubr.f32.gmra.mrb[0].mxu0 %v520
        %v675 = vpop.f32.mrb[0].mxu0
        %v676 = vadd.f32 %v469, %v675
        %v677 = vpop.f32.mrb[0].mxu0
        %v678 = vadd.f32 %v473, %v677
        %679 = vmatprep.mubr.f32.mxu0 0.0
        %680 = vmatmul.mubr.f32.gmra.mrb[0].mxu0 %v523
        %v681 = vpop.f32.mrb[0].mxu0
        %v682 = vadd.f32 %v469, %v681
        %v683 = vpop.f32.mrb[0].mxu0
        %v684 = vadd.f32 %v473, %v683
        %685 = vdwg.mxu0
        %v686 = vmax.f32 %v592, 0.0
        %v687 = vmax.f32 %v594, 0.0
        %v688 = vmax.f32 %v598, 0.0
        %v689 = vmax.f32 %v600, 0.0
        %v690 = vmax.f32 %v604, 0.0
        %v691 = vmax.f32 %v606, 0.0
        %v692 = vmax.f32 %v610, 0.0
        %v693 = vmax.f32 %v612, 0.0
        %v694 = vmax.f32 %v616, 0.0
        %v695 = vmax.f32 %v618, 0.0
        %v696 = vmax.f32 %v622, 0.0
        %v697 = vmax.f32 %v624, 0.0
        %v698 = vmax.f32 %v628, 0.0
        %v699 = vmax.f32 %v630, 0.0
        %v700 = vmax.f32 %v634, 0.0
        %v701 = vmax.f32 %v636, 0.0
        %v702 = vmax.f32 %v640, 0.0
        %v703 = vmax.f32 %v642, 0.0
        %v704 = vmax.f32 %v646, 0.0
        %v705 = vmax.f32 %v648, 0.0
        %v706 = vmax.f32 %v652, 0.0
        %v707 = vmax.f32 %v654, 0.0
        %v708 = vmax.f32 %v658, 0.0
        %v709 = vmax.f32 %v660, 0.0
        %v710 = vmax.f32 %v664, 0.0
        %v711 = vmax.f32 %v666, 0.0
        %v712 = vmax.f32 %v670, 0.0
        %v713 = vmax.f32 %v672, 0.0
        %v714 = vmax.f32 %v676, 0.0
        %v715 = vmax.f32 %v678, 0.0
        %v716 = vmax.f32 %v682, 0.0
        %v717 = vmax.f32 %v684, 0.0
        %v718 = vld [vmem:[%s3] sm:$0xff]
        %v719 = vld [vmem:[%s3 + $0x8] sm:$0xff]
        %v720 = vld [vmem:[%s3 + $0x10] sm:$0xff]
        %v721 = vld [vmem:[%s3 + $0x18] sm:$0xff]
        %v722 = vld [vmem:[%s3 + $0x20] sm:$0xff]
        %v723 = vld [vmem:[%s3 + $0x28] sm:$0xff]
        %v724 = vld [vmem:[%s3 + $0x30] sm:$0xff]
        %v725 = vld [vmem:[%s3 + $0x38] sm:$0xff]
        %v726 = vld [vmem:[%s3 + $0x40] sm:$0xff]
        %v727 = vld [vmem:[%s3 + $0x48] sm:$0xff]
        %v728 = vld [vmem:[%s3 + $0x50] sm:$0xff]
        %v729 = vld [vmem:[%s3 + $0x58] sm:$0xff]
        %v730 = vld [vmem:[%s3 + $0x60] sm:$0xff]
        %v731 = vld [vmem:[%s3 + $0x68] sm:$0xff]
        %v732 = vld [vmem:[%s3 + $0x70] sm:$0xff]
        %v733 = vld [vmem:[%s3 + $0x78] sm:$0xff]
        %v734 = vld [vmem:[%s3 + $0x80] sm:$0xff]
        %v735 = vld [vmem:[%s3 + $0x88] sm:$0xff]
        %v736 = vld [vmem:[%s3 + $0x90] sm:$0xff]
        %v737 = vld [vmem:[%s3 + $0x98] sm:$0xff]
        %v738 = vld [vmem:[%s3 + $0xa0] sm:$0xff]
        %v739 = vld [vmem:[%s3 + $0xa8] sm:$0xff]
        %v740 = vld [vmem:[%s3 + $0xb0] sm:$0xff]
        %v741 = vld [vmem:[%s3 + $0xb8] sm:$0xff]
        %v742 = vld [vmem:[%s3 + $0xc0] sm:$0xff]
        %v743 = vld [vmem:[%s3 + $0xc8] sm:$0xff]
        %v744 = vld [vmem:[%s3 + $0xd0] sm:$0xff]
        %v745 = vld [vmem:[%s3 + $0xd8] sm:$0xff]
        %v746 = vld [vmem:[%s3 + $0xe0] sm:$0xff]
        %v747 = vld [vmem:[%s3 + $0xe8] sm:$0xff]
        %v748 = vld [vmem:[%s3 + $0xf0] sm:$0xff]
        %v749 = vld [vmem:[%s3 + $0xf8] sm:$0xff]
        %v750 = vld [vmem:[%s4] sm:$0x1]
        %v752 = vlaneseq
        %v753 = vshrl.u32 %v752, 7
        %v754 = vsub.s32 0, %v753
        %v755 = vrot.slane %v750, %v754
        %757 = vmatprep.subr.mxu0 0.0
        %758 = vmatpush1.msra.mxu0 %v718
        %759 = vmatprep.subr.mxu0 0.0
        %760 = vmatpush1.msra.mxu0 %v719
        %761 = vmatprep.subr.mxu0 0.0
        %762 = vmatpush1.msra.mxu0 %v720
        %763 = vmatprep.subr.mxu0 0.0
        %764 = vmatpush1.msra.mxu0 %v721
        %765 = vmatprep.subr.mxu0 0.0
        %766 = vmatpush1.msra.mxu0 %v722
        %767 = vmatprep.subr.mxu0 0.0
        %768 = vmatpush1.msra.mxu0 %v723
        %769 = vmatprep.subr.mxu0 0.0
        %770 = vmatpush1.msra.mxu0 %v724
        %771 = vmatprep.subr.mxu0 0.0
        %772 = vmatpush1.msra.mxu0 %v725
        %773 = vmatprep.subr.mxu0 0.0
        %774 = vmatpush1.msra.mxu0 %v726
        %775 = vmatprep.subr.mxu0 0.0
        %776 = vmatpush1.msra.mxu0 %v727
        %777 = vmatprep.subr.mxu0 0.0
        %778 = vmatpush1.msra.mxu0 %v728
        %779 = vmatprep.subr.mxu0 0.0
        %780 = vmatpush1.msra.mxu0 %v729
        %781 = vmatprep.subr.mxu0 0.0
        %782 = vmatpush1.msra.mxu0 %v730
        %783 = vmatprep.subr.mxu0 0.0
        %784 = vmatpush1.msra.mxu0 %v731
        %785 = vmatprep.subr.mxu0 0.0
        %786 = vmatpush1.msra.mxu0 %v732
        %787 = vmatprep.subr.mxu0 0.0
        %788 = vmatpush1.msra.mxu0 %v733
        %789 = vmatprep.subr.mxu0 0.0
        %790 = vmatpush1.msra.mxu0 %v734
        %791 = vmatprep.subr.mxu0 0.0
        %792 = vmatpush1.msra.mxu0 %v735
        %793 = vmatprep.subr.mxu0 0.0
        %794 = vmatpush1.msra.mxu0 %v736
        %795 = vmatprep.subr.mxu0 0.0
        %796 = vmatpush1.msra.mxu0 %v737
        %797 = vmatprep.subr.mxu0 0.0
        %798 = vmatpush1.msra.mxu0 %v738
        %799 = vmatprep.subr.mxu0 0.0
        %800 = vmatpush1.msra.mxu0 %v739
        %801 = vmatprep.subr.mxu0 0.0
        %802 = vmatpush1.msra.mxu0 %v740
        %803 = vmatprep.subr.mxu0 0.0
        %804 = vmatpush1.msra.mxu0 %v741
        %805 = vmatprep.subr.mxu0 0.0
        %806 = vmatpush1.msra.mxu0 %v742
        %807 = vmatprep.subr.mxu0 0.0
        %808 = vmatpush1.msra.mxu0 %v743
        %809 = vmatprep.subr.mxu0 0.0
        %810 = vmatpush1.msra.mxu0 %v744
        %811 = vmatprep.subr.mxu0 0.0
        %812 = vmatpush1.msra.mxu0 %v745
        %813 = vmatprep.subr.mxu0 0.0
        %814 = vmatpush1.msra.mxu0 %v746
        %815 = vmatprep.subr.mxu0 0.0
        %816 = vmatpush1.msra.mxu0 %v747
        %817 = vmatprep.subr.mxu0 0.0
        %818 = vmatpush1.msra.mxu0 %v748
        %819 = vmatprep.subr.mxu0 0.0
        %820 = vmatpush1.msra.mxu0 %v749
        %821 = vmatprep.mubr.f32.mxu0 %v687
        %822 = vmatmul.mubr.f32.gmra.mrb[0].mxu0 %v686
        %v823 = vpop.f32.mrb[0].mxu0
        %v824 = vadd.f32 %v755, %v823
        %v825 = vpop.f32.mrb[0].mxu0
        %826 = vmatprep.mubr.f32.mxu0 %v689
        %827 = vmatmul.mubr.f32.gmra.mrb[0].mxu0 %v688
        %v828 = vpop.f32.mrb[0].mxu0
        %v829 = vadd.f32 %v755, %v828
        %v830 = vpop.f32.mrb[0].mxu0
        %831 = vmatprep.mubr.f32.mxu0 %v691
        %832 = vmatmul.mubr.f32.gmra.mrb[0].mxu0 %v690
        %v833 = vpop.f32.mrb[0].mxu0
        %v834 = vadd.f32 %v755, %v833
        %v835 = vpop.f32.mrb[0].mxu0
        %836 = vmatprep.mubr.f32.mxu0 %v693
        %837 = vmatmul.mubr.f32.gmra.mrb[0].mxu0 %v692
        %v838 = vpop.f32.mrb[0].mxu0
        %v839 = vadd.f32 %v755, %v838
        %v840 = vpop.f32.mrb[0].mxu0
        %841 = vmatprep.mubr.f32.mxu0 %v695
        %842 = vmatmul.mubr.f32.gmra.mrb[0].mxu0 %v694
        %v843 = vpop.f32.mrb[0].mxu0
        %v844 = vadd.f32 %v755, %v843
        %v845 = vpop.f32.mrb[0].mxu0
        %846 = vmatprep.mubr.f32.mxu0 %v697
        %847 = vmatmul.mubr.f32.gmra.mrb[0].mxu0 %v696
        %v848 = vpop.f32.mrb[0].mxu0
        %v849 = vadd.f32 %v755, %v848
        %v850 = vpop.f32.mrb[0].mxu0
        %851 = vmatprep.mubr.f32.mxu0 %v699
        %852 = vmatmul.mubr.f32.gmra.mrb[0].mxu0 %v698
        %v853 = vpop.f32.mrb[0].mxu0
        %v854 = vadd.f32 %v755, %v853
        %v855 = vpop.f32.mrb[0].mxu0
        %856 = vmatprep.mubr.f32.mxu0 %v701
        %857 = vmatmul.mubr.f32.gmra.mrb[0].mxu0 %v700
        %v858 = vpop.f32.mrb[0].mxu0
        %v859 = vadd.f32 %v755, %v858
        %v860 = vpop.f32.mrb[0].mxu0
        %861 = vmatprep.mubr.f32.mxu0 %v703
        %862 = vmatmul.mubr.f32.gmra.mrb[0].mxu0 %v702
        %v863 = vpop.f32.mrb[0].mxu0
        %v864 = vadd.f32 %v755, %v863
        %v865 = vpop.f32.mrb[0].mxu0
        %866 = vmatprep.mubr.f32.mxu0 %v705
        %867 = vmatmul.mubr.f32.gmra.mrb[0].mxu0 %v704
        %v868 = vpop.f32.mrb[0].mxu0
        %v869 = vadd.f32 %v755, %v868
        %v870 = vpop.f32.mrb[0].mxu0
        %871 = vmatprep.mubr.f32.mxu0 %v707
        %872 = vmatmul.mubr.f32.gmra.mrb[0].mxu0 %v706
        %v873 = vpop.f32.mrb[0].mxu0
        %v874 = vadd.f32 %v755, %v873
        %v875 = vpop.f32.mrb[0].mxu0
        %876 = vmatprep.mubr.f32.mxu0 %v709
        %877 = vmatmul.mubr.f32.gmra.mrb[0].mxu0 %v708
        %v878 = vpop.f32.mrb[0].mxu0
        %v879 = vadd.f32 %v755, %v878
        %v880 = vpop.f32.mrb[0].mxu0
        %881 = vmatprep.mubr.f32.mxu0 %v711
        %882 = vmatmul.mubr.f32.gmra.mrb[0].mxu0 %v710
        %v883 = vpop.f32.mrb[0].mxu0
        %v884 = vadd.f32 %v755, %v883
        %v885 = vpop.f32.mrb[0].mxu0
        %886 = vmatprep.mubr.f32.mxu0 %v713
        %887 = vmatmul.mubr.f32.gmra.mrb[0].mxu0 %v712
        %v888 = vpop.f32.mrb[0].mxu0
        %v889 = vadd.f32 %v755, %v888
        %v890 = vpop.f32.mrb[0].mxu0
        %891 = vmatprep.mubr.f32.mxu0 %v715
        %892 = vmatmul.mubr.f32.gmra.mrb[0].mxu0 %v714
        %v893 = vpop.f32.mrb[0].mxu0
        %v894 = vadd.f32 %v755, %v893
        %v895 = vpop.f32.mrb[0].mxu0
        %896 = vmatprep.mubr.f32.mxu0 %v717
        %897 = vmatmul.mubr.f32.gmra.mrb[0].mxu0 %v716
        %v898 = vpop.f32.mrb[0].mxu0
        %v899 = vadd.f32 %v755, %v898
        %v900 = vpop.f32.mrb[0].mxu0
        %901 = vdwg.mxu0
        %v902 = vmax.f32 %v824, 0.0
        %v903 = vmax.f32 %v829, 0.0
        %v904 = vmax.f32 %v834, 0.0
        %v905 = vmax.f32 %v839, 0.0
        %v906 = vmax.f32 %v844, 0.0
        %v907 = vmax.f32 %v849, 0.0
        %v908 = vmax.f32 %v854, 0.0
        %v909 = vmax.f32 %v859, 0.0
        %v910 = vmax.f32 %v864, 0.0
        %v911 = vmax.f32 %v869, 0.0
        %v912 = vmax.f32 %v874, 0.0
        %v913 = vmax.f32 %v879, 0.0
        %v914 = vmax.f32 %v884, 0.0
        %v915 = vmax.f32 %v889, 0.0
        %v916 = vmax.f32 %v894, 0.0
        %v917 = vmax.f32 %v899, 0.0
        %v918 = vld [vmem:[#allocation2] sm:$0xff]
        %v919 = vld [vmem:[#allocation2 + $0x8] sm:$0xff]
        %v920 = vld [vmem:[#allocation2 + $0x10] sm:$0xff]
        %v921 = vld [vmem:[#allocation2 + $0x18] sm:$0xff]
        %v922 = vld [vmem:[#allocation2 + $0x20] sm:$0xff]
        %v923 = vld [vmem:[#allocation2 + $0x28] sm:$0xff]
        %v924 = vld [vmem:[#allocation2 + $0x30] sm:$0xff]
        %v925 = vld [vmem:[#allocation2 + $0x38] sm:$0xff]
        %v926 = vld [vmem:[#allocation2 + $0x40] sm:$0xff]
        %v927 = vld [vmem:[#allocation2 + $0x48] sm:$0xff]
        %v928 = vld [vmem:[#allocation2 + $0x50] sm:$0xff]
        %v929 = vld [vmem:[#allocation2 + $0x58] sm:$0xff]
        %v930 = vld [vmem:[#allocation2 + $0x60] sm:$0xff]
        %v931 = vld [vmem:[#allocation2 + $0x68] sm:$0xff]
        %v932 = vld [vmem:[#allocation2 + $0x70] sm:$0xff]
        %v933 = vld [vmem:[#allocation2 + $0x78] sm:$0xff]
        %v934 = vld [vmem:[%s6] sm:$0x1]
        %v936 = vlaneseq
        %v937 = vshrl.u32 %v936, 7
        %v938 = vsub.s32 0, %v937
        %v939 = vrot.slane %v934, %v938
        %941 = vmatprep.subr.mxu0 0.0
        %942 = vmatpush1.msra.mxu0 %v918
        %943 = vmatprep.subr.mxu0 0.0
        %944 = vmatpush1.msra.mxu0 %v919
        %945 = vmatprep.subr.mxu0 0.0
        %946 = vmatpush1.msra.mxu0 %v920
        %947 = vmatprep.subr.mxu0 0.0
        %948 = vmatpush1.msra.mxu0 %v921
        %949 = vmatprep.subr.mxu0 0.0
        %950 = vmatpush1.msra.mxu0 %v922
        %951 = vmatprep.subr.mxu0 0.0
        %952 = vmatpush1.msra.mxu0 %v923
        %953 = vmatprep.subr.mxu0 0.0
        %954 = vmatpush1.msra.mxu0 %v924
        %955 = vmatprep.subr.mxu0 0.0
        %956 = vmatpush1.msra.mxu0 %v925
        %957 = vmatprep.subr.mxu0 0.0
        %958 = vmatpush1.msra.mxu0 %v926
        %959 = vmatprep.subr.mxu0 0.0
        %960 = vmatpush1.msra.mxu0 %v927
        %961 = vmatprep.subr.mxu0 0.0
        %962 = vmatpush1.msra.mxu0 %v928
        %963 = vmatprep.subr.mxu0 0.0
        %964 = vmatpush1.msra.mxu0 %v929
        %965 = vmatprep.subr.mxu0 0.0
        %966 = vmatpush1.msra.mxu0 %v930
        %967 = vmatprep.subr.mxu0 0.0
        %968 = vmatpush1.msra.mxu0 %v931
        %969 = vmatprep.subr.mxu0 0.0
        %970 = vmatpush1.msra.mxu0 %v932
        %971 = vmatprep.subr.mxu0 0.0
        %972 = vmatpush1.msra.mxu0 %v933
        %973 = vmatprep.subr.mxu0 0.0
        %974 = vmatpush1.msra.mxu0 0.0
        %975 = vmatprep.subr.mxu0 0.0
        %976 = vmatpush1.msra.mxu0 0.0
        %977 = vmatprep.subr.mxu0 0.0
        %978 = vmatpush1.msra.mxu0 0.0
        %979 = vmatprep.subr.mxu0 0.0
        %980 = vmatpush1.msra.mxu0 0.0
        %981 = vmatprep.subr.mxu0 0.0
        %982 = vmatpush1.msra.mxu0 0.0
        %983 = vmatprep.subr.mxu0 0.0
        %984 = vmatpush1.msra.mxu0 0.0
        %985 = vmatprep.subr.mxu0 0.0
        %986 = vmatpush1.msra.mxu0 0.0
        %987 = vmatprep.subr.mxu0 0.0
        %988 = vmatpush1.msra.mxu0 0.0
        %989 = vmatprep.subr.mxu0 0.0
        %990 = vmatpush1.msra.mxu0 0.0
        %991 = vmatprep.subr.mxu0 0.0
        %992 = vmatpush1.msra.mxu0 0.0
        %993 = vmatprep.subr.mxu0 0.0
        %994 = vmatpush1.msra.mxu0 0.0
        %995 = vmatprep.subr.mxu0 0.0
        %996 = vmatpush1.msra.mxu0 0.0
        %997 = vmatprep.subr.mxu0 0.0
        %998 = vmatpush1.msra.mxu0 0.0
        %999 = vmatprep.subr.mxu0 0.0
        %1000 = vmatpush1.msra.mxu0 0.0
        %1001 = vmatprep.subr.mxu0 0.0
        %1002 = vmatpush1.msra.mxu0 0.0
        %1003 = vmatprep.subr.mxu0 0.0
        %1004 = vmatpush1.msra.mxu0 0.0
        %1005 = vmatprep.mubr.f32.mxu0 0.0
        %1006 = vmatmul.mubr.f32.gmra.mrb[0].mxu0 %v902
        %v1007 = vpop.f32.mrb[0].mxu0
        %v1008 = vadd.f32 %v939, %v1007
        %v1009 = vpop.f32.mrb[0].mxu0
        %1010 = vmatprep.mubr.f32.mxu0 0.0
        %1011 = vmatmul.mubr.f32.gmra.mrb[0].mxu0 %v903
        %v1012 = vpop.f32.mrb[0].mxu0
        %v1013 = vadd.f32 %v939, %v1012
        %v1014 = vpop.f32.mrb[0].mxu0
        %1015 = vmatprep.mubr.f32.mxu0 0.0
        %1016 = vmatmul.mubr.f32.gmra.mrb[0].mxu0 %v904
        %v1017 = vpop.f32.mrb[0].mxu0
        %v1018 = vadd.f32 %v939, %v1017
        %v1019 = vpop.f32.mrb[0].mxu0
        %1020 = vmatprep.mubr.f32.mxu0 0.0
        %1021 = vmatmul.mubr.f32.gmra.mrb[0].mxu0 %v905
        %v1022 = vpop.f32.mrb[0].mxu0
        %v1023 = vadd.f32 %v939, %v1022
        %v1024 = vpop.f32.mrb[0].mxu0
        %1025 = vmatprep.mubr.f32.mxu0 0.0
        %1026 = vmatmul.mubr.f32.gmra.mrb[0].mxu0 %v906
        %v1027 = vpop.f32.mrb[0].mxu0
        %v1028 = vadd.f32 %v939, %v1027
        %v1029 = vpop.f32.mrb[0].mxu0
        %1030 = vmatprep.mubr.f32.mxu0 0.0
        %1031 = vmatmul.mubr.f32.gmra.mrb[0].mxu0 %v907
        %v1032 = vpop.f32.mrb[0].mxu0
        %v1033 = vadd.f32 %v939, %v1032
        %v1034 = vpop.f32.mrb[0].mxu0
        %1035 = vmatprep.mubr.f32.mxu0 0.0
        %1036 = vmatmul.mubr.f32.gmra.mrb[0].mxu0 %v908
        %v1037 = vpop.f32.mrb[0].mxu0
        %v1038 = vadd.f32 %v939, %v1037
        %v1039 = vpop.f32.mrb[0].mxu0
        %1040 = vmatprep.mubr.f32.mxu0 0.0
        %1041 = vmatmul.mubr.f32.gmra.mrb[0].mxu0 %v909
        %v1042 = vpop.f32.mrb[0].mxu0
        %v1043 = vadd.f32 %v939, %v1042
        %v1044 = vpop.f32.mrb[0].mxu0
        %1045 = vmatprep.mubr.f32.mxu0 0.0
        %1046 = vmatmul.mubr.f32.gmra.mrb[0].mxu0 %v910
        %v1047 = vpop.f32.mrb[0].mxu0
        %v1048 = vadd.f32 %v939, %v1047
        %v1049 = vpop.f32.mrb[0].mxu0
        %1050 = vmatprep.mubr.f32.mxu0 0.0
        %1051 = vmatmul.mubr.f32.gmra.mrb[0].mxu0 %v911
        %v1052 = vpop.f32.mrb[0].mxu0
        %v1053 = vadd.f32 %v939, %v1052
        %v1054 = vpop.f32.mrb[0].mxu0
        %1055 = vmatprep.mubr.f32.mxu0 0.0
        %1056 = vmatmul.mubr.f32.gmra.mrb[0].mxu0 %v912
        %v1057 = vpop.f32.mrb[0].mxu0
        %v1058 = vadd.f32 %v939, %v1057
        %v1059 = vpop.f32.mrb[0].mxu0
        %1060 = vmatprep.mubr.f32.mxu0 0.0
        %1061 = vmatmul.mubr.f32.gmra.mrb[0].mxu0 %v913
        %v1062 = vpop.f32.mrb[0].mxu0
        %v1063 = vadd.f32 %v939, %v1062
        %v1064 = vpop.f32.mrb[0].mxu0
        %1065 = vmatprep.mubr.f32.mxu0 0.0
        %1066 = vmatmul.mubr.f32.gmra.mrb[0].mxu0 %v914
        %v1067 = vpop.f32.mrb[0].mxu0
        %v1068 = vadd.f32 %v939, %v1067
        %v1069 = vpop.f32.mrb[0].mxu0
        %1070 = vmatprep.mubr.f32.mxu0 0.0
        %1071 = vmatmul.mubr.f32.gmra.mrb[0].mxu0 %v915
        %v1072 = vpop.f32.mrb[0].mxu0
        %v1073 = vadd.f32 %v939, %v1072
        %v1074 = vpop.f32.mrb[0].mxu0
        %1075 = vmatprep.mubr.f32.mxu0 0.0
        %1076 = vmatmul.mubr.f32.gmra.mrb[0].mxu0 %v916
        %v1077 = vpop.f32.mrb[0].mxu0
        %v1078 = vadd.f32 %v939, %v1077
        %v1079 = vpop.f32.mrb[0].mxu0
        %1080 = vmatprep.mubr.f32.mxu0 0.0
        %1081 = vmatmul.mubr.f32.gmra.mrb[0].mxu0 %v917
        %v1082 = vpop.f32.mrb[0].mxu0
        %v1083 = vadd.f32 %v939, %v1082
        %v1084 = vpop.f32.mrb[0].mxu0
        %1085 = vdwg.mxu0
        %v1086 = vmax.f32 %v1008, 0.0
        %v1087 = vmax.f32 %v1013, 0.0
        %v1088 = vmax.f32 %v1018, 0.0
        %v1089 = vmax.f32 %v1023, 0.0
        %v1090 = vmax.f32 %v1028, 0.0
        %v1091 = vmax.f32 %v1033, 0.0
        %v1092 = vmax.f32 %v1038, 0.0
        %v1093 = vmax.f32 %v1043, 0.0
        %v1094 = vmax.f32 %v1048, 0.0
        %v1095 = vmax.f32 %v1053, 0.0
        %v1096 = vmax.f32 %v1058, 0.0
        %v1097 = vmax.f32 %v1063, 0.0
        %v1098 = vmax.f32 %v1068, 0.0
        %v1099 = vmax.f32 %v1073, 0.0
        %v1100 = vmax.f32 %v1078, 0.0
        %v1101 = vmax.f32 %v1083, 0.0
        %v1102 = vld [vmem:[#allocation5] sm:$0xff]
        %v1103 = vld [vmem:[#allocation5 + $0x8] sm:$0xff]
        %v1104 = vld [vmem:[#allocation5 + $0x10] sm:$0xff]
        %v1105 = vld [vmem:[#allocation5 + $0x18] sm:$0xff]
        %v1106 = vld [vmem:[#allocation5 + $0x20] sm:$0xff]
        %v1107 = vld [vmem:[#allocation5 + $0x28] sm:$0xff]
        %v1108 = vld [vmem:[#allocation5 + $0x30] sm:$0xff]
        %v1109 = vld [vmem:[#allocation5 + $0x38] sm:$0xff]
        %v1110 = vld [vmem:[#allocation5 + $0x40] sm:$0xff]
        %v1111 = vld [vmem:[#allocation5 + $0x48] sm:$0xff]
        %v1112 = vld [vmem:[#allocation5 + $0x50] sm:$0xff]
        %v1113 = vld [vmem:[#allocation5 + $0x58] sm:$0xff]
        %v1114 = vld [vmem:[#allocation5 + $0x60] sm:$0xff]
        %v1115 = vld [vmem:[#allocation5 + $0x68] sm:$0xff]
        %v1116 = vld [vmem:[#allocation5 + $0x70] sm:$0xff]
        %v1117 = vld [vmem:[#allocation5 + $0x78] sm:$0xff]
        %v1118 = vld [vmem:[%s8] sm:$0x1]
        %v1120 = vlaneseq
        %v1121 = vshrl.u32 %v1120, 7
        %v1122 = vsub.s32 0, %v1121
        %v1123 = vrot.slane %v1118, %v1122
        %1125 = vmatprep.subr.mxu0 0.0
        %1126 = vmatpush1.msra.mxu0 %v1102
        %1127 = vmatprep.subr.mxu0 0.0
        %1128 = vmatpush1.msra.mxu0 %v1103
        %1129 = vmatprep.subr.mxu0 0.0
        %1130 = vmatpush1.msra.mxu0 %v1104
        %1131 = vmatprep.subr.mxu0 0.0
        %1132 = vmatpush1.msra.mxu0 %v1105
        %1133 = vmatprep.subr.mxu0 0.0
        %1134 = vmatpush1.msra.mxu0 %v1106
        %1135 = vmatprep.subr.mxu0 0.0
        %1136 = vmatpush1.msra.mxu0 %v1107
        %1137 = vmatprep.subr.mxu0 0.0
        %1138 = vmatpush1.msra.mxu0 %v1108
        %1139 = vmatprep.subr.mxu0 0.0
        %1140 = vmatpush1.msra.mxu0 %v1109
        %1141 = vmatprep.subr.mxu0 0.0
        %1142 = vmatpush1.msra.mxu0 %v1110
        %1143 = vmatprep.subr.mxu0 0.0
        %1144 = vmatpush1.msra.mxu0 %v1111
        %1145 = vmatprep.subr.mxu0 0.0
        %1146 = vmatpush1.msra.mxu0 %v1112
        %1147 = vmatprep.subr.mxu0 0.0
        %1148 = vmatpush1.msra.mxu0 %v1113
        %1149 = vmatprep.subr.mxu0 0.0
        %1150 = vmatpush1.msra.mxu0 %v1114
        %1151 = vmatprep.subr.mxu0 0.0
        %1152 = vmatpush1.msra.mxu0 %v1115
        %1153 = vmatprep.subr.mxu0 0.0
        %1154 = vmatpush1.msra.mxu0 %v1116
        %1155 = vmatprep.subr.mxu0 0.0
        %1156 = vmatpush1.msra.mxu0 %v1117
        %1157 = vmatprep.subr.mxu0 0.0
        %1158 = vmatpush1.msra.mxu0 0.0
        %1159 = vmatprep.subr.mxu0 0.0
        %1160 = vmatpush1.msra.mxu0 0.0
        %1161 = vmatprep.subr.mxu0 0.0
        %1162 = vmatpush1.msra.mxu0 0.0
        %1163 = vmatprep.subr.mxu0 0.0
        %1164 = vmatpush1.msra.mxu0 0.0
        %1165 = vmatprep.subr.mxu0 0.0
        %1166 = vmatpush1.msra.mxu0 0.0
        %1167 = vmatprep.subr.mxu0 0.0
        %1168 = vmatpush1.msra.mxu0 0.0
        %1169 = vmatprep.subr.mxu0 0.0
        %1170 = vmatpush1.msra.mxu0 0.0
        %1171 = vmatprep.subr.mxu0 0.0
        %1172 = vmatpush1.msra.mxu0 0.0
        %1173 = vmatprep.subr.mxu0 0.0
        %1174 = vmatpush1.msra.mxu0 0.0
        %1175 = vmatprep.subr.mxu0 0.0
        %1176 = vmatpush1.msra.mxu0 0.0
        %1177 = vmatprep.subr.mxu0 0.0
        %1178 = vmatpush1.msra.mxu0 0.0
        %1179 = vmatprep.subr.mxu0 0.0
        %1180 = vmatpush1.msra.mxu0 0.0
        %1181 = vmatprep.subr.mxu0 0.0
        %1182 = vmatpush1.msra.mxu0 0.0
        %1183 = vmatprep.subr.mxu0 0.0
        %1184 = vmatpush1.msra.mxu0 0.0
        %1185 = vmatprep.subr.mxu0 0.0
        %1186 = vmatpush1.msra.mxu0 0.0
        %1187 = vmatprep.subr.mxu0 0.0
        %1188 = vmatpush1.msra.mxu0 0.0
        %1189 = vmatprep.mubr.f32.mxu0 0.0
        %1190 = vmatmul.mubr.f32.gmra.mrb[0].mxu0 %v1086
        %v1191 = vpop.f32.mrb[0].mxu0
        %v1192 = vadd.f32 %v1123, %v1191
        %v1193 = vpop.f32.mrb[0].mxu0
        %1194 = vmatprep.mubr.f32.mxu0 0.0
        %1195 = vmatmul.mubr.f32.gmra.mrb[0].mxu0 %v1087
        %v1196 = vpop.f32.mrb[0].mxu0
        %v1197 = vadd.f32 %v1123, %v1196
        %v1198 = vpop.f32.mrb[0].mxu0
        %1199 = vmatprep.mubr.f32.mxu0 0.0
        %1200 = vmatmul.mubr.f32.gmra.mrb[0].mxu0 %v1088
        %v1201 = vpop.f32.mrb[0].mxu0
        %v1202 = vadd.f32 %v1123, %v1201
        %v1203 = vpop.f32.mrb[0].mxu0
        %1204 = vmatprep.mubr.f32.mxu0 0.0
        %1205 = vmatmul.mubr.f32.gmra.mrb[0].mxu0 %v1089
        %v1206 = vpop.f32.mrb[0].mxu0
        %v1207 = vadd.f32 %v1123, %v1206
        %v1208 = vpop.f32.mrb[0].mxu0
        %1209 = vmatprep.mubr.f32.mxu0 0.0
        %1210 = vmatmul.mubr.f32.gmra.mrb[0].mxu0 %v1090
        %v1211 = vpop.f32.mrb[0].mxu0
        %v1212 = vadd.f32 %v1123, %v1211
        %v1213 = vpop.f32.mrb[0].mxu0
        %1214 = vmatprep.mubr.f32.mxu0 0.0
        %1215 = vmatmul.mubr.f32.gmra.mrb[0].mxu0 %v1091
        %v1216 = vpop.f32.mrb[0].mxu0
        %v1217 = vadd.f32 %v1123, %v1216
        %v1218 = vpop.f32.mrb[0].mxu0
        %1219 = vmatprep.mubr.f32.mxu0 0.0
        %1220 = vmatmul.mubr.f32.gmra.mrb[0].mxu0 %v1092
        %v1221 = vpop.f32.mrb[0].mxu0
        %v1222 = vadd.f32 %v1123, %v1221
        %v1223 = vpop.f32.mrb[0].mxu0
        %1224 = vmatprep.mubr.f32.mxu0 0.0
        %1225 = vmatmul.mubr.f32.gmra.mrb[0].mxu0 %v1093
        %v1226 = vpop.f32.mrb[0].mxu0
        %v1227 = vadd.f32 %v1123, %v1226
        %v1228 = vpop.f32.mrb[0].mxu0
        %1229 = vmatprep.mubr.f32.mxu0 0.0
        %1230 = vmatmul.mubr.f32.gmra.mrb[0].mxu0 %v1094
        %v1231 = vpop.f32.mrb[0].mxu0
        %v1232 = vadd.f32 %v1123, %v1231
        %v1233 = vpop.f32.mrb[0].mxu0
        %1234 = vmatprep.mubr.f32.mxu0 0.0
        %1235 = vmatmul.mubr.f32.gmra.mrb[0].mxu0 %v1095
        %v1236 = vpop.f32.mrb[0].mxu0
        %v1237 = vadd.f32 %v1123, %v1236
        %v1238 = vpop.f32.mrb[0].mxu0
        %1239 = vmatprep.mubr.f32.mxu0 0.0
        %1240 = vmatmul.mubr.f32.gmra.mrb[0].mxu0 %v1096
        %v1241 = vpop.f32.mrb[0].mxu0
        %v1242 = vadd.f32 %v1123, %v1241
        %v1243 = vpop.f32.mrb[0].mxu0
        %1244 = vmatprep.mubr.f32.mxu0 0.0
        %1245 = vmatmul.mubr.f32.gmra.mrb[0].mxu0 %v1097
        %v1246 = vpop.f32.mrb[0].mxu0
        %v1247 = vadd.f32 %v1123, %v1246
        %v1248 = vpop.f32.mrb[0].mxu0
        %1249 = vmatprep.mubr.f32.mxu0 0.0
        %1250 = vmatmul.mubr.f32.gmra.mrb[0].mxu0 %v1098
        %v1251 = vpop.f32.mrb[0].mxu0
        %v1252 = vadd.f32 %v1123, %v1251
        %v1253 = vpop.f32.mrb[0].mxu0
        %1254 = vmatprep.mubr.f32.mxu0 0.0
        %1255 = vmatmul.mubr.f32.gmra.mrb[0].mxu0 %v1099
        %v1256 = vpop.f32.mrb[0].mxu0
        %v1257 = vadd.f32 %v1123, %v1256
        %v1258 = vpop.f32.mrb[0].mxu0
        %1259 = vmatprep.mubr.f32.mxu0 0.0
        %1260 = vmatmul.mubr.f32.gmra.mrb[0].mxu0 %v1100
        %v1261 = vpop.f32.mrb[0].mxu0
        %v1262 = vadd.f32 %v1123, %v1261
        %v1263 = vpop.f32.mrb[0].mxu0
        %1264 = vmatprep.mubr.f32.mxu0 0.0
        %1265 = vmatmul.mubr.f32.gmra.mrb[0].mxu0 %v1101
        %v1266 = vpop.f32.mrb[0].mxu0
        %v1267 = vadd.f32 %v1123, %v1266
        %v1268 = vpop.f32.mrb[0].mxu0
        %1269 = vdwg.mxu0
        %v1270 = vmax.f32 %v1192, 0.0
        %v1271 = vmax.f32 %v1197, 0.0
        %v1272 = vmax.f32 %v1202, 0.0
        %v1273 = vmax.f32 %v1207, 0.0
        %v1274 = vmax.f32 %v1212, 0.0
        %v1275 = vmax.f32 %v1217, 0.0
        %v1276 = vmax.f32 %v1222, 0.0
        %v1277 = vmax.f32 %v1227, 0.0
        %v1278 = vmax.f32 %v1232, 0.0
        %v1279 = vmax.f32 %v1237, 0.0
        %v1280 = vmax.f32 %v1242, 0.0
        %v1281 = vmax.f32 %v1247, 0.0
        %v1282 = vmax.f32 %v1252, 0.0
        %v1283 = vmax.f32 %v1257, 0.0
        %v1284 = vmax.f32 %v1262, 0.0
        %v1285 = vmax.f32 %v1267, 0.0
        %v1286 = vld [vmem:[#allocation7] sm:$0xff]
        %v1287 = vld [vmem:[#allocation7 + $0x8] sm:$0xff]
        %v1288 = vld [vmem:[#allocation7 + $0x10] sm:$0xff]
        %v1289 = vld [vmem:[#allocation7 + $0x18] sm:$0xff]
        %v1290 = vld [vmem:[#allocation7 + $0x20] sm:$0xff]
        %v1291 = vld [vmem:[#allocation7 + $0x28] sm:$0xff]
        %v1292 = vld [vmem:[#allocation7 + $0x30] sm:$0xff]
        %v1293 = vld [vmem:[#allocation7 + $0x38] sm:$0xff]
        %v1294 = vld [vmem:[#allocation7 + $0x40] sm:$0xff]
        %v1295 = vld [vmem:[#allocation7 + $0x48] sm:$0xff]
        %v1296 = vld [vmem:[#allocation7 + $0x50] sm:$0xff]
        %v1297 = vld [vmem:[#allocation7 + $0x58] sm:$0xff]
        %v1298 = vld [vmem:[#allocation7 + $0x60] sm:$0xff]
        %v1299 = vld [vmem:[#allocation7 + $0x68] sm:$0xff]
        %v1300 = vld [vmem:[#allocation7 + $0x70] sm:$0xff]
        %v1301 = vld [vmem:[#allocation7 + $0x78] sm:$0xff]
        %v1302 = vld [vmem:[%s10] sm:$0x1]
        %v1304 = vlaneseq
        %v1305 = vshrl.u32 %v1304, 7
        %v1306 = vsub.s32 0, %v1305
        %v1307 = vrot.slane %v1302, %v1306
        %1309 = vmatprep.subr.mxu0 0.0
        %1310 = vmatpush1.msra.mxu0 %v1286
        %1311 = vmatprep.subr.mxu0 0.0
        %1312 = vmatpush1.msra.mxu0 %v1287
        %1313 = vmatprep.subr.mxu0 0.0
        %1314 = vmatpush1.msra.mxu0 %v1288
        %1315 = vmatprep.subr.mxu0 0.0
        %1316 = vmatpush1.msra.mxu0 %v1289
        %1317 = vmatprep.subr.mxu0 0.0
        %1318 = vmatpush1.msra.mxu0 %v1290
        %1319 = vmatprep.subr.mxu0 0.0
        %1320 = vmatpush1.msra.mxu0 %v1291
        %1321 = vmatprep.subr.mxu0 0.0
        %1322 = vmatpush1.msra.mxu0 %v1292
        %1323 = vmatprep.subr.mxu0 0.0
        %1324 = vmatpush1.msra.mxu0 %v1293
        %1325 = vmatprep.subr.mxu0 0.0
        %1326 = vmatpush1.msra.mxu0 %v1294
        %1327 = vmatprep.subr.mxu0 0.0
        %1328 = vmatpush1.msra.mxu0 %v1295
        %1329 = vmatprep.subr.mxu0 0.0
        %1330 = vmatpush1.msra.mxu0 %v1296
        %1331 = vmatprep.subr.mxu0 0.0
        %1332 = vmatpush1.msra.mxu0 %v1297
        %1333 = vmatprep.subr.mxu0 0.0
        %1334 = vmatpush1.msra.mxu0 %v1298
        %1335 = vmatprep.subr.mxu0 0.0
        %1336 = vmatpush1.msra.mxu0 %v1299
        %1337 = vmatprep.subr.mxu0 0.0
        %1338 = vmatpush1.msra.mxu0 %v1300
        %1339 = vmatprep.subr.mxu0 0.0
        %1340 = vmatpush1.msra.mxu0 %v1301
        %1341 = vmatprep.subr.mxu0 0.0
        %1342 = vmatpush1.msra.mxu0 0.0
        %1343 = vmatprep.subr.mxu0 0.0
        %1344 = vmatpush1.msra.mxu0 0.0
        %1345 = vmatprep.subr.mxu0 0.0
        %1346 = vmatpush1.msra.mxu0 0.0
        %1347 = vmatprep.subr.mxu0 0.0
        %1348 = vmatpush1.msra.mxu0 0.0
        %1349 = vmatprep.subr.mxu0 0.0
        %1350 = vmatpush1.msra.mxu0 0.0
        %1351 = vmatprep.subr.mxu0 0.0
        %1352 = vmatpush1.msra.mxu0 0.0
        %1353 = vmatprep.subr.mxu0 0.0
        %1354 = vmatpush1.msra.mxu0 0.0
        %1355 = vmatprep.subr.mxu0 0.0
        %1356 = vmatpush1.msra.mxu0 0.0
        %1357 = vmatprep.subr.mxu0 0.0
        %1358 = vmatpush1.msra.mxu0 0.0
        %1359 = vmatprep.subr.mxu0 0.0
        %1360 = vmatpush1.msra.mxu0 0.0
        %1361 = vmatprep.subr.mxu0 0.0
        %1362 = vmatpush1.msra.mxu0 0.0
        %1363 = vmatprep.subr.mxu0 0.0
        %1364 = vmatpush1.msra.mxu0 0.0
        %1365 = vmatprep.subr.mxu0 0.0
        %1366 = vmatpush1.msra.mxu0 0.0
        %1367 = vmatprep.subr.mxu0 0.0
        %1368 = vmatpush1.msra.mxu0 0.0
        %1369 = vmatprep.subr.mxu0 0.0
        %1370 = vmatpush1.msra.mxu0 0.0
        %1371 = vmatprep.subr.mxu0 0.0
        %1372 = vmatpush1.msra.mxu0 0.0
        %1373 = vmatprep.mubr.f32.mxu0 0.0
        %1374 = vmatmul.mubr.f32.gmra.mrb[0].mxu0 %v1270
        %v1375 = vpop.f32.mrb[0].mxu0
        %v1376 = vadd.f32 %v1307, %v1375
        %v1377 = vpop.f32.mrb[0].mxu0
        %1378 = vmatprep.mubr.f32.mxu0 0.0
        %1379 = vmatmul.mubr.f32.gmra.mrb[0].mxu0 %v1271
        %v1380 = vpop.f32.mrb[0].mxu0
        %v1381 = vadd.f32 %v1307, %v1380
        %v1382 = vpop.f32.mrb[0].mxu0
        %1383 = vmatprep.mubr.f32.mxu0 0.0
        %1384 = vmatmul.mubr.f32.gmra.mrb[0].mxu0 %v1272
        %v1385 = vpop.f32.mrb[0].mxu0
        %v1386 = vadd.f32 %v1307, %v1385
        %v1387 = vpop.f32.mrb[0].mxu0
        %1388 = vmatprep.mubr.f32.mxu0 0.0
        %1389 = vmatmul.mubr.f32.gmra.mrb[0].mxu0 %v1273
        %v1390 = vpop.f32.mrb[0].mxu0
        %v1391 = vadd.f32 %v1307, %v1390
        %v1392 = vpop.f32.mrb[0].mxu0
        %1393 = vmatprep.mubr.f32.mxu0 0.0
        %1394 = vmatmul.mubr.f32.gmra.mrb[0].mxu0 %v1274
        %v1395 = vpop.f32.mrb[0].mxu0
        %v1396 = vadd.f32 %v1307, %v1395
        %v1397 = vpop.f32.mrb[0].mxu0
        %1398 = vmatprep.mubr.f32.mxu0 0.0
        %1399 = vmatmul.mubr.f32.gmra.mrb[0].mxu0 %v1275
        %v1400 = vpop.f32.mrb[0].mxu0
        %v1401 = vadd.f32 %v1307, %v1400
        %v1402 = vpop.f32.mrb[0].mxu0
        %1403 = vmatprep.mubr.f32.mxu0 0.0
        %1404 = vmatmul.mubr.f32.gmra.mrb[0].mxu0 %v1276
        %v1405 = vpop.f32.mrb[0].mxu0
        %v1406 = vadd.f32 %v1307, %v1405
        %v1407 = vpop.f32.mrb[0].mxu0
        %1408 = vmatprep.mubr.f32.mxu0 0.0
        %1409 = vmatmul.mubr.f32.gmra.mrb[0].mxu0 %v1277
        %v1410 = vpop.f32.mrb[0].mxu0
        %v1411 = vadd.f32 %v1307, %v1410
        %v1412 = vpop.f32.mrb[0].mxu0
        %1413 = vmatprep.mubr.f32.mxu0 0.0
        %1414 = vmatmul.mubr.f32.gmra.mrb[0].mxu0 %v1278
        %v1415 = vpop.f32.mrb[0].mxu0
        %v1416 = vadd.f32 %v1307, %v1415
        %v1417 = vpop.f32.mrb[0].mxu0
        %1418 = vmatprep.mubr.f32.mxu0 0.0
        %1419 = vmatmul.mubr.f32.gmra.mrb[0].mxu0 %v1279
        %v1420 = vpop.f32.mrb[0].mxu0
        %v1421 = vadd.f32 %v1307, %v1420
        %v1422 = vpop.f32.mrb[0].mxu0
        %1423 = vmatprep.mubr.f32.mxu0 0.0
        %1424 = vmatmul.mubr.f32.gmra.mrb[0].mxu0 %v1280
        %v1425 = vpop.f32.mrb[0].mxu0
        %v1426 = vadd.f32 %v1307, %v1425
        %v1427 = vpop.f32.mrb[0].mxu0
        %1428 = vmatprep.mubr.f32.mxu0 0.0
        %1429 = vmatmul.mubr.f32.gmra.mrb[0].mxu0 %v1281
        %v1430 = vpop.f32.mrb[0].mxu0
        %v1431 = vadd.f32 %v1307, %v1430
        %v1432 = vpop.f32.mrb[0].mxu0
        %1433 = vmatprep.mubr.f32.mxu0 0.0
        %1434 = vmatmul.mubr.f32.gmra.mrb[0].mxu0 %v1282
        %v1435 = vpop.f32.mrb[0].mxu0
        %v1436 = vadd.f32 %v1307, %v1435
        %v1437 = vpop.f32.mrb[0].mxu0
        %1438 = vmatprep.mubr.f32.mxu0 0.0
        %1439 = vmatmul.mubr.f32.gmra.mrb[0].mxu0 %v1283
        %v1440 = vpop.f32.mrb[0].mxu0
        %v1441 = vadd.f32 %v1307, %v1440
        %v1442 = vpop.f32.mrb[0].mxu0
        %1443 = vmatprep.mubr.f32.mxu0 0.0
        %1444 = vmatmul.mubr.f32.gmra.mrb[0].mxu0 %v1284
        %v1445 = vpop.f32.mrb[0].mxu0
        %v1446 = vadd.f32 %v1307, %v1445
        %v1447 = vpop.f32.mrb[0].mxu0
        %1448 = vmatprep.mubr.f32.mxu0 0.0
        %1449 = vmatmul.mubr.f32.gmra.mrb[0].mxu0 %v1285
        %v1450 = vpop.f32.mrb[0].mxu0
        %v1451 = vadd.f32 %v1307, %v1450
        %v1452 = vpop.f32.mrb[0].mxu0
        %1453 = vdwg.mxu0
        %v1454 = vmax.f32 %v1376, 0.0
        %v1455 = vmax.f32 %v1381, 0.0
        %v1456 = vmax.f32 %v1386, 0.0
        %v1457 = vmax.f32 %v1391, 0.0
        %v1458 = vmax.f32 %v1396, 0.0
        %v1459 = vmax.f32 %v1401, 0.0
        %v1460 = vmax.f32 %v1406, 0.0
        %v1461 = vmax.f32 %v1411, 0.0
        %v1462 = vmax.f32 %v1416, 0.0
        %v1463 = vmax.f32 %v1421, 0.0
        %v1464 = vmax.f32 %v1426, 0.0
        %v1465 = vmax.f32 %v1431, 0.0
        %v1466 = vmax.f32 %v1436, 0.0
        %v1467 = vmax.f32 %v1441, 0.0
        %v1468 = vmax.f32 %v1446, 0.0
        %v1469 = vmax.f32 %v1451, 0.0
        %1470 = vst [vmem:[%s424] sm:$0xff] %v1454
        %1471 = vst [vmem:[%s424 + $0x8] sm:$0xff] %v1455
        %1472 = vst [vmem:[%s424 + $0x10] sm:$0xff] %v1456
        %1473 = vst [vmem:[%s424 + $0x18] sm:$0xff] %v1457
        %1474 = vst [vmem:[%s424 + $0x20] sm:$0xff] %v1458
        %1475 = vst [vmem:[%s424 + $0x28] sm:$0xff] %v1459
        %1476 = vst [vmem:[%s424 + $0x30] sm:$0xff] %v1460
        %1477 = vst [vmem:[%s424 + $0x38] sm:$0xff] %v1461
        %1478 = vst [vmem:[%s424 + $0x40] sm:$0xff] %v1462
        %1479 = vst [vmem:[%s424 + $0x48] sm:$0xff] %v1463
        %1480 = vst [vmem:[%s424 + $0x50] sm:$0xff] %v1464
        %1481 = vst [vmem:[%s424 + $0x58] sm:$0xff] %v1465
        %1482 = vst [vmem:[%s424 + $0x60] sm:$0xff] %v1466
        %1483 = vst [vmem:[%s424 + $0x68] sm:$0xff] %v1467
        %1484 = vst [vmem:[%s424 + $0x70] sm:$0xff] %v1468
        %1485 = vst [vmem:[%s424 + $0x78] sm:$0xff] %v1469
        %s1486 = sand.u32 %s271, 1
        %s1487 = scalar_lea.sflag [#allocation4], %s1486
        %s1488 = sand.u32 %s271, 1
        %s1489 = smul.addr %s1488, 128
        %s1490 = scalar_lea.vmem [#allocation8], %s1489
        // Predicated region
        $region77: #{tpu_custom_call.1} parent=63 // pred_check
          %p1491 = pneg %p281
        $region78: #{tpu_custom_call.1} parent=63 // pred_check_branch
          %1493 = sbr.rel (%p1491) target = $region80
        $region79: #{tpu_custom_call.1} parent=63 // pred_region
          %s1494 = smul.u32 16, %s27
          %s1496 = ssub.s32 2048, 2048
          %1497 = vsyncadd %s1487, %s1496
          %s1498 = smul.addr %s1494, 128
          %s1499 = scalar_lea.hbm %s11, %s1498
          %s1500 = sshll.u32 %s1490, 4
          %s1501 = int_to_ptr.vmem [resolvable:$true] %s1500
          %1506 = dma.vmem_to_hbm [thread:$0]  %s1501, 2048, %s1499, %s1487, 128, 128, 8
        $region80: #{tpu_custom_call.1} parent=63 // pred_fallthru
          _
      $region64: #{tpu_custom_call.1} parent=5 // pred_fallthru
        _
      %p1507 = scmp.le.s32.totalorder 2, %s22
      // Predicated region
      $region81: #{tpu_custom_call.1} parent=5 // pred_check
        %p1508 = pneg %p1507
      $region82: #{tpu_custom_call.1} parent=5 // pred_check_branch
        %1510 = sbr.rel (%p1508) target = $region84
      $region83: #{tpu_custom_call.1} parent=5 // pred_region
        %s1511 = ssub.s32 %s22, 2
        // Predicated region
        $region85: #{tpu_custom_call.1} parent=83 // pred_check
          %p1512 = pneg %p287
        $region86: #{tpu_custom_call.1} parent=83 // pred_check_branch
          %1514 = sbr.rel (%p1512) target = $region88
        $region87: #{tpu_custom_call.1} parent=83 // pred_region
          %s1515 = sand.u32 %s272, 1
          %s1516 = scalar_lea.sflag [#allocation4], %s1515
          %s1517 = sand.u32 %s272, 1
          %s1518 = smul.addr %s1517, 128
          %s1519 = scalar_lea.vmem [#allocation8], %s1518
          %1520 = dma.done %s1516, 2048
        $region88: #{tpu_custom_call.1} parent=83 // pred_fallthru
          _
      $region84: #{tpu_custom_call.1} parent=5 // pred_fallthru
        _
    $region6: #{tpu_custom_call.1} parent=1 // loop_footer
      %s26 = sadd.s32 1, %s22
    $region7: #{tpu_custom_call.1} parent=1 // loop_footer_branch
      %21 = sbr.rel target = $region3
    $region8: #{tpu_custom_call.1} parent=1 // loop_exit
      _
    %1521 = vsyncpa [#allocation3], 1
    %s1522 = scalar_lea.sflag [#allocation3], 1
    %1523 = vsyncpa %s1522, 1
    %1524 = vsyncpa [#allocation6], 1
    %1525 = vsyncpa [#allocation4], 1
    %s1526 = scalar_lea.sflag [#allocation4], 1
    %1527 = vsyncpa %s1526, 1

</llo_original>
